<compile_context>
chip_gen: v5e
topology: v5e:2x2
jax: 0.10.0
libtpu: 0.0.40
codegen_flags: <defaults>
</compile_context>

<pallas_src>
import functools

import numpy as np

import jax
import jax.numpy as jnp
from jax.experimental import pallas as pl
from jax.experimental.pallas import tpu as pltpu


def _dilation_matrix(h, w, wf, s, pe, wd, n_cols):
    """0/1 matrix E so that  y_flat(16, h*wf) @ E  ==  flattened(dilate_S(y) edge-padded by pe).

    Row i*wf + j (j < w) has a single 1 at column (pe + i*s)*wd + (pe + j*s);
    the garbage frame columns (j >= w) of y_flat get all-zero rows.
    """
    rows = (np.arange(h)[:, None] * wf + np.arange(w)[None, :]).reshape(-1)
    cols = ((pe + np.arange(h)[:, None] * s) * wd
            + (pe + np.arange(w)[None, :] * s)).reshape(-1)
    e = np.zeros((h * wf, n_cols), np.float32)
    e[rows, cols] = 1.0
    return jnp.asarray(e, dtype=jnp.bfloat16)


def _upsample_block_kernel(x_ref, w1_ref, b1_ref, e_ref, w2_ref, b2_ref, o_ref,
                           *, k1, wf, n1, kt, wd, h_s, w_s, n_out):
    # x_ref : (cin_p, L1)        f32  zero-padded input image, flattened (row stride wf)
    # w1_ref: (16, k1*k1*cin_p)  bf16 conv1 weights, columns ordered (kh, kw, ci)
    # b1_ref: (16, 1)            f32
    # e_ref : (n1, n_d)          bf16 0/1 dilation + edge-pad scatter matrix
    # w2_ref: (16, kt*kt*16)     bf16 ConvTranspose as valid-conv weights (flipped)
    # b2_ref: (16, 1)            f32
    # o_ref : (16, n_out)        f32  cropped output frame (row stride wd)

    # ---- Conv2d(x_in_c, 16, 3, 1, 1): flat-frame im2col + ONE MXU matmul ----
    xv = x_ref[...]
    p1 = jnp.concatenate(
        [xv[:, kh * wf + kw: kh * wf + kw + n1]
         for kh in range(k1) for kw in range(k1)], axis=0)      # (k1*k1*cin_p, n1)
    y = jnp.dot(w1_ref[...], p1.astype(jnp.bfloat16),
                preferred_element_type=jnp.float32)             # (16, n1) f32
    y = y + b1_ref[...]

    # ---- stride-S zero dilation + (K-1-P) edge pad as a 0/1 scatter matmul ----
    yd = jnp.dot(y.astype(jnp.bfloat16), e_ref[...],
                 preferred_element_type=jnp.float32)            # (16, n_d) f32
    ydb = yd.astype(jnp.bfloat16)

    # ---- ConvTranspose2d(16, 16, K, S, P) as a valid conv on the dilated frame:
    #      im2col + ONE matmul; the center crop is folded into the slab offsets ----
    p2 = jnp.concatenate(
        [ydb[:, (h_s + kh) * wd + (w_s + kw): (h_s + kh) * wd + (w_s + kw) + n_out]
         for kh in range(kt) for kw in range(kt)], axis=0)      # (kt*kt*16, n_out)
    up = jnp.dot(w2_ref[...], p2, preferred_element_type=jnp.float32)
    o_ref[...] = up + b2_ref[...]


class UpsampleBlock:
    """JAX/Pallas port of models/driu.py::UpsampleBlock (deterministic init)."""

    K1 = 3  # the module hard-codes nn.Conv2d(x_in_c, 16, 3, 1, 1)

    def __init__(self, x_in_c, up_kernel_size, up_stride, up_padding, key):
        k1, k2, k3, k4 = jax.random.split(key, 4)
        self.cin = x_in_c
        self.K, self.S, self.P = up_kernel_size, up_stride, up_padding
        assert self.K - 1 - self.P >= 0, "unsupported padding for this impl"

        # nn.Conv2d(x_in_c, 16, 3, 1, 1) -- PyTorch layout (Cout, Cin, kh, kw).
        fan_in = x_in_c * 3 * 3
        bound = float(1.0 / np.sqrt(fan_in))
        self.conv_w = jax.random.uniform(k1, (16, x_in_c, 3, 3), jnp.float32,
                                         -bound, bound)
        self.conv_b = jax.random.uniform(k2, (16,), jnp.float32, -bound, bound)

        # nn.ConvTranspose2d(16, 16, K, S, P) -- PyTorch layout (Cin, Cout, kh, kw).
        K = self.K
        fan_in_t = 16 * K * K
        bound_t = float(1.0 / np.sqrt(fan_in_t))
        self.up_w = jax.random.uniform(k3, (16, 16, K, K), jnp.float32,
                                       -bound_t, bound_t)
        self.up_b = jax.random.uniform(k4, (16,), jnp.float32, -bound_t, bound_t)

        # ---- kernel-ready parameters (bf16 operands, f32 biases) ----
        # pad the channel dim to a multiple of 8 so the in-kernel im2col concat
        # is sublane-tile aligned.
        self.cin_p = ((x_in_c + 7) // 8) * 8
        w1p = jnp.pad(self.conv_w,
                      ((0, 0), (0, self.cin_p - x_in_c), (0, 0), (0, 0)))
        # columns ordered (kh, kw, ci) to match the im2col row order.
        self.w1m = jnp.transpose(w1p, (0, 2, 3, 1)).reshape(
            16, self.K1 * self.K1 * self.cin_p).astype(jnp.bfloat16)
        # ConvTranspose == valid conv with spatially flipped, in/out swapped weights.
        wflip = self.up_w[:, :, ::-1, ::-1]
        self.w2m = jnp.transpose(wflip, (1, 2, 3, 0)).reshape(
            16, K * K * 16).astype(jnp.bfloat16)
        self.b1c = self.conv_b.reshape(16, 1)
        self.b2c = self.up_b.reshape(16, 1)

    def __call__(self, x_in, input_res):
        img_h, img_w = int(input_res[0]), int(input_res[1])
        N, Cin, H, W = x_in.shape
        assert Cin == self.cin
        K, S, P, K1 = self.K, self.S, self.P, self.K1
        pe = K - 1 - P
        H_up = (H - 1) * S - 2 * P + K
        W_up = (W - 1) * S - 2 * P + K
        h_s = (H_up - img_h) // 2
        w_s = (W_up - img_w) // 2
        assert 0 <= h_s and h_s + img_h <= H_up, "crop larger than upsampled map"
        assert 0 <= w_s and w_s + img_w <= W_up, "crop larger than upsampled map"

        Hd = H_up + K - 1                 # dilated + edge-padded height
        Wd = W_up + K - 1                 # dilated + edge-padded width (frame stride)
        Wf = W + 2                        # conv1 flat-frame row stride (spatial pad 1)
        n1 = H * Wf                       # conv1 output frame length
        L1 = (H + 2) * Wf + (K1 - 1)      # conv1 input frame length (incl. tail zeros)
        n_out = img_h * Wd                # cropped output frame length
        n_d = max(Hd * Wd, (h_s + img_h + K - 1) * Wd + w_s + K - 1)

        # Only batch 0 / channels 0:16 are returned by the module -> compute just that.
        x0 = x_in[0].astype(jnp.float32)
        xp = jnp.pad(x0, ((0, self.cin_p - Cin), (1, 1), (1, 1)))
        x_flat = jnp.pad(xp.reshape(self.cin_p, -1), ((0, 0), (0, K1 - 1)))

        e_mat = _dilation_matrix(H, W, Wf, S, pe, Wd, n_d)

        kernel = functools.partial(
            _upsample_block_kernel, k1=K1, wf=Wf, n1=n1, kt=K, wd=Wd,
            h_s=h_s, w_s=w_s, n_out=n_out)

        out_flat = pl.pallas_call(
            kernel,
            out_shape=jax.ShapeDtypeStruct((16, n_out), jnp.float32),
            grid_spec=pltpu.PrefetchScalarGridSpec(
                num_scalar_prefetch=0,
                grid=(1,),
                in_specs=[
                    pl.BlockSpec((self.cin_p, L1), lambda i: (0, 0)),
                    pl.BlockSpec((16, K1 * K1 * self.cin_p), lambda i: (0, 0)),
                    pl.BlockSpec((16, 1), lambda i: (0, 0)),
                    pl.BlockSpec((n1, n_d), lambda i: (0, 0)),
                    pl.BlockSpec((16, K * K * 16), lambda i: (0, 0)),
                    pl.BlockSpec((16, 1), lambda i: (0, 0)),
                ],
                out_specs=pl.BlockSpec((16, n_out), lambda i: (0, 0)),
            ),
            compiler_params=pltpu.CompilerParams(
                dimension_semantics=("arbitrary",)),
        )(x_flat, self.w1m, self.b1c, e_mat, self.w2m, self.b2c)

        # Frame columns [0, img_w) of each row are the cropped output; the reshape
        # to NCHW is a free (contiguous) reshape.
        out = out_flat.reshape(16, img_h, Wd)[:, :, :img_w]
        return out[None]

    def reference(self, x_in, input_res):
        """Pure-JAX (XLA) reference with PyTorch semantics, for validation."""
        img_h, img_w = int(input_res[0]), int(input_res[1])
        K, S, P = self.K, self.S, self.P
        pe = K - 1 - P
        x = x_in[0:1].astype(jnp.float32)
        y = jax.lax.conv_general_dilated(
            x, self.conv_w, window_strides=(1, 1), padding=((1, 1), (1, 1)),
            dimension_numbers=("NCHW", "OIHW", "NCHW"),
            precision=jax.lax.Precision.HIGHEST) + self.conv_b.reshape(1, 16, 1, 1)
        w_f = jnp.transpose(self.up_w[:, :, ::-1, ::-1], (1, 0, 2, 3))
        up = jax.lax.conv_general_dilated(
            y, w_f, window_strides=(1, 1), padding=((pe, pe), (pe, pe)),
            lhs_dilation=(S, S), dimension_numbers=("NCHW", "OIHW", "NCHW"),
            precision=jax.lax.Precision.HIGHEST) + self.up_b.reshape(1, 16, 1, 1)
        up_h, up_w_ = up.shape[2], up.shape[3]
        h_crop = up_h - img_h
        h_s = h_crop // 2
        h_e = up_h - (h_crop - h_s)
        w_crop = up_w_ - img_w
        w_s = w_crop // 2
        w_e = up_w_ - (w_crop - w_s)
        return up[0:1, 0:16, h_s:h_e, w_s:w_e]


if __name__ == "__main__":
    key = jax.random.PRNGKey(0)
    kx, kp = jax.random.split(key)

    # x_in: (N=2, C=4, H=16, W=16) NCHW, target resolution 32x32
    # (ConvTranspose output is 34x34, center-cropped to 32x32).
    x_in = jax.random.normal(kx, (2, 4, 16, 16), jnp.float32)
    block = UpsampleBlock(x_in_c=4, up_kernel_size=4, up_stride=2,
                          up_padding=0, key=kp)

    out = jax.block_until_ready(block(x_in, (32, 32)))
    assert out.shape == (1, 16, 32, 32), out.shape
    assert out.dtype == jnp.float32

    ref = jax.block_until_ready(block.reference(x_in, (32, 32)))
    max_err = float(jnp.max(jnp.abs(out - ref)))
    assert max_err < 5e-2, f"max abs error vs reference: {max_err}"
    print("KERNEL_OK")
</pallas_src>

<mosaic_0001>
module attributes {stable_mosaic.version = 11 : i64} {
  func.func @_upsample_block_kernel(%arg0: i32, %arg1: memref<8x326xf32, #tpu.memory_space<vmem>>, %arg2: memref<16x72xbf16, #tpu.memory_space<vmem>>, %arg3: memref<16x1xf32, #tpu.memory_space<vmem>>, %arg4: memref<288x1369xbf16, #tpu.memory_space<vmem>>, %arg5: memref<16x256xbf16, #tpu.memory_space<vmem>>, %arg6: memref<16x1xf32, #tpu.memory_space<vmem>>, %arg7: memref<16x1184xf32, #tpu.memory_space<vmem>>) attributes {dimension_semantics = [#tpu.dimension_semantics<arbitrary>], iteration_bounds = array<i64: 1>, scalar_prefetch = 0 : i64, scratch_operands = 0 : i64, tpu.core_type = #tpu.core_type<tc>, window_params = [{pipeline_mode = #tpu.pipeline_mode<synchronous>, transform_indices = @transform_0, window_bounds = array<i64: 8, 326>}, {pipeline_mode = #tpu.pipeline_mode<synchronous>, transform_indices = @transform_1, window_bounds = array<i64: 16, 72>}, {pipeline_mode = #tpu.pipeline_mode<synchronous>, transform_indices = @transform_2, window_bounds = array<i64: 16, 1>}, {pipeline_mode = #tpu.pipeline_mode<synchronous>, transform_indices = @transform_3, window_bounds = array<i64: 288, 1369>}, {pipeline_mode = #tpu.pipeline_mode<synchronous>, transform_indices = @transform_4, window_bounds = array<i64: 16, 256>}, {pipeline_mode = #tpu.pipeline_mode<synchronous>, transform_indices = @transform_5, window_bounds = array<i64: 16, 1>}, {pipeline_mode = #tpu.pipeline_mode<synchronous>, transform_indices = @transform_6, window_bounds = array<i64: 16, 1184>}]} {
    %c0 = arith.constant 0 : index
    %c0_0 = arith.constant 0 : index
    %0 = vector.load %arg1[%c0, %c0_0] : memref<8x326xf32, #tpu.memory_space<vmem>>, vector<8x326xf32>
    %1 = vector.extract_strided_slice %0 {offsets = [0, 0], sizes = [8, 288], strides = [1, 1]} : vector<8x326xf32> to vector<8x288xf32>
    %2 = vector.extract_strided_slice %0 {offsets = [0, 1], sizes = [8, 288], strides = [1, 1]} : vector<8x326xf32> to vector<8x288xf32>
    %3 = vector.extract_strided_slice %0 {offsets = [0, 2], sizes = [8, 288], strides = [1, 1]} : vector<8x326xf32> to vector<8x288xf32>
    %4 = vector.extract_strided_slice %0 {offsets = [0, 18], sizes = [8, 288], strides = [1, 1]} : vector<8x326xf32> to vector<8x288xf32>
    %5 = vector.extract_strided_slice %0 {offsets = [0, 19], sizes = [8, 288], strides = [1, 1]} : vector<8x326xf32> to vector<8x288xf32>
    %6 = vector.extract_strided_slice %0 {offsets = [0, 20], sizes = [8, 288], strides = [1, 1]} : vector<8x326xf32> to vector<8x288xf32>
    %7 = vector.extract_strided_slice %0 {offsets = [0, 36], sizes = [8, 288], strides = [1, 1]} : vector<8x326xf32> to vector<8x288xf32>
    %8 = vector.extract_strided_slice %0 {offsets = [0, 37], sizes = [8, 288], strides = [1, 1]} : vector<8x326xf32> to vector<8x288xf32>
    %9 = vector.extract_strided_slice %0 {offsets = [0, 38], sizes = [8, 288], strides = [1, 1]} : vector<8x326xf32> to vector<8x288xf32>
    %10 = tpu.concatenate %1, %2, %3, %4, %5, %6, %7, %8, %9 in 0 : vector<8x288xf32>, vector<8x288xf32>, vector<8x288xf32>, vector<8x288xf32>, vector<8x288xf32>, vector<8x288xf32>, vector<8x288xf32>, vector<8x288xf32>, vector<8x288xf32> -> vector<72x288xf32>
    %c0_1 = arith.constant 0 : index
    %c0_2 = arith.constant 0 : index
    %11 = vector.load %arg2[%c0_1, %c0_2] : memref<16x72xbf16, #tpu.memory_space<vmem>>, vector<16x72xbf16>
    %12 = arith.truncf %10 : vector<72x288xf32> to vector<72x288xbf16>
    %cst = arith.constant dense<0.000000e+00> : vector<16x288xf32>
    %13 = tpu.matmul %11, %12, %cst {dimension_numbers = #tpu.dot_dimension_numbers<[1], [0], [0], [1], [0, 0, 1, 1], [], []>} : vector<16x72xbf16>, vector<72x288xbf16>, vector<16x288xf32> -> vector<16x288xf32>
    %c0_3 = arith.constant 0 : index
    %c0_4 = arith.constant 0 : index
    %14 = vector.load %arg3[%c0_3, %c0_4] : memref<16x1xf32, #tpu.memory_space<vmem>>, vector<16x1xf32>
    %15 = vector.broadcast %14 : vector<16x1xf32> to vector<16x288xf32>
    %16 = arith.addf %13, %15 : vector<16x288xf32>
    %17 = arith.truncf %16 : vector<16x288xf32> to vector<16x288xbf16>
    %c0_5 = arith.constant 0 : index
    %c0_6 = arith.constant 0 : index
    %18 = vector.load %arg4[%c0_5, %c0_6] : memref<288x1369xbf16, #tpu.memory_space<vmem>>, vector<288x1369xbf16>
    %cst_7 = arith.constant dense<0.000000e+00> : vector<16x1369xf32>
    %19 = tpu.matmul %17, %18, %cst_7 {dimension_numbers = #tpu.dot_dimension_numbers<[1], [0], [0], [1], [0, 0, 1, 1], [], []>} : vector<16x288xbf16>, vector<288x1369xbf16>, vector<16x1369xf32> -> vector<16x1369xf32>
    %20 = arith.truncf %19 : vector<16x1369xf32> to vector<16x1369xbf16>
    %21 = vector.extract_strided_slice %20 {offsets = [0, 38], sizes = [16, 1184], strides = [1, 1]} : vector<16x1369xbf16> to vector<16x1184xbf16>
    %22 = vector.extract_strided_slice %20 {offsets = [0, 39], sizes = [16, 1184], strides = [1, 1]} : vector<16x1369xbf16> to vector<16x1184xbf16>
    %23 = vector.extract_strided_slice %20 {offsets = [0, 40], sizes = [16, 1184], strides = [1, 1]} : vector<16x1369xbf16> to vector<16x1184xbf16>
    %24 = vector.extract_strided_slice %20 {offsets = [0, 41], sizes = [16, 1184], strides = [1, 1]} : vector<16x1369xbf16> to vector<16x1184xbf16>
    %25 = vector.extract_strided_slice %20 {offsets = [0, 75], sizes = [16, 1184], strides = [1, 1]} : vector<16x1369xbf16> to vector<16x1184xbf16>
    %26 = vector.extract_strided_slice %20 {offsets = [0, 76], sizes = [16, 1184], strides = [1, 1]} : vector<16x1369xbf16> to vector<16x1184xbf16>
    %27 = vector.extract_strided_slice %20 {offsets = [0, 77], sizes = [16, 1184], strides = [1, 1]} : vector<16x1369xbf16> to vector<16x1184xbf16>
    %28 = vector.extract_strided_slice %20 {offsets = [0, 78], sizes = [16, 1184], strides = [1, 1]} : vector<16x1369xbf16> to vector<16x1184xbf16>
    %29 = vector.extract_strided_slice %20 {offsets = [0, 112], sizes = [16, 1184], strides = [1, 1]} : vector<16x1369xbf16> to vector<16x1184xbf16>
    %30 = vector.extract_strided_slice %20 {offsets = [0, 113], sizes = [16, 1184], strides = [1, 1]} : vector<16x1369xbf16> to vector<16x1184xbf16>
    %31 = vector.extract_strided_slice %20 {offsets = [0, 114], sizes = [16, 1184], strides = [1, 1]} : vector<16x1369xbf16> to vector<16x1184xbf16>
    %32 = vector.extract_strided_slice %20 {offsets = [0, 115], sizes = [16, 1184], strides = [1, 1]} : vector<16x1369xbf16> to vector<16x1184xbf16>
    %33 = vector.extract_strided_slice %20 {offsets = [0, 149], sizes = [16, 1184], strides = [1, 1]} : vector<16x1369xbf16> to vector<16x1184xbf16>
    %34 = vector.extract_strided_slice %20 {offsets = [0, 150], sizes = [16, 1184], strides = [1, 1]} : vector<16x1369xbf16> to vector<16x1184xbf16>
    %35 = vector.extract_strided_slice %20 {offsets = [0, 151], sizes = [16, 1184], strides = [1, 1]} : vector<16x1369xbf16> to vector<16x1184xbf16>
    %36 = vector.extract_strided_slice %20 {offsets = [0, 152], sizes = [16, 1184], strides = [1, 1]} : vector<16x1369xbf16> to vector<16x1184xbf16>
    %37 = tpu.concatenate %21, %22, %23, %24, %25, %26, %27, %28, %29, %30, %31, %32, %33, %34, %35, %36 in 0 : vector<16x1184xbf16>, vector<16x1184xbf16>, vector<16x1184xbf16>, vector<16x1184xbf16>, vector<16x1184xbf16>, vector<16x1184xbf16>, vector<16x1184xbf16>, vector<16x1184xbf16>, vector<16x1184xbf16>, vector<16x1184xbf16>, vector<16x1184xbf16>, vector<16x1184xbf16>, vector<16x1184xbf16>, vector<16x1184xbf16>, vector<16x1184xbf16>, vector<16x1184xbf16> -> vector<256x1184xbf16>
    %c0_8 = arith.constant 0 : index
    %c0_9 = arith.constant 0 : index
    %38 = vector.load %arg5[%c0_8, %c0_9] : memref<16x256xbf16, #tpu.memory_space<vmem>>, vector<16x256xbf16>
    %cst_10 = arith.constant dense<0.000000e+00> : vector<16x1184xf32>
    %39 = tpu.matmul %38, %37, %cst_10 {dimension_numbers = #tpu.dot_dimension_numbers<[1], [0], [0], [1], [0, 0, 1, 1], [], []>} : vector<16x256xbf16>, vector<256x1184xbf16>, vector<16x1184xf32> -> vector<16x1184xf32>
    %c0_11 = arith.constant 0 : index
    %c0_12 = arith.constant 0 : index
    %40 = vector.load %arg6[%c0_11, %c0_12] : memref<16x1xf32, #tpu.memory_space<vmem>>, vector<16x1xf32>
    %41 = vector.broadcast %40 : vector<16x1xf32> to vector<16x1184xf32>
    %42 = arith.addf %39, %41 : vector<16x1184xf32>
    %c0_13 = arith.constant 0 : index
    %c0_14 = arith.constant 0 : index
    %43 = vector.load %arg7[%c0_13, %c0_14] : memref<16x1184xf32, #tpu.memory_space<vmem>>, vector<16x1184xf32>
    tpu.vector_store %arg7[%c0_13, %c0_14], %42 {strides = array<i32>} : memref<16x1184xf32, #tpu.memory_space<vmem>>, vector<16x1184xf32>,
    return
  }
  func.func @transform_0(%arg0: i32) -> (i32, i32) {
    %c0_i32 = arith.constant 0 : i32
    %c0_i32_0 = arith.constant 0 : i32
    %c0_i32_1 = arith.constant 0 : i32
    return %c0_i32, %c0_i32_0 : i32, i32
  }
  func.func @transform_1(%arg0: i32) -> (i32, i32) {
    %c0_i32 = arith.constant 0 : i32
    %c0_i32_0 = arith.constant 0 : i32
    %c0_i32_1 = arith.constant 0 : i32
    return %c0_i32, %c0_i32_0 : i32, i32
  }
  func.func @transform_2(%arg0: i32) -> (i32, i32) {
    %c0_i32 = arith.constant 0 : i32
    %c0_i32_0 = arith.constant 0 : i32
    %c0_i32_1 = arith.constant 0 : i32
    return %c0_i32, %c0_i32_0 : i32, i32
  }
  func.func @transform_3(%arg0: i32) -> (i32, i32) {
    %c0_i32 = arith.constant 0 : i32
    %c0_i32_0 = arith.constant 0 : i32
    %c0_i32_1 = arith.constant 0 : i32
    return %c0_i32, %c0_i32_0 : i32, i32
  }
  func.func @transform_4(%arg0: i32) -> (i32, i32) {
    %c0_i32 = arith.constant 0 : i32
    %c0_i32_0 = arith.constant 0 : i32
    %c0_i32_1 = arith.constant 0 : i32
    return %c0_i32, %c0_i32_0 : i32, i32
  }
  func.func @transform_5(%arg0: i32) -> (i32, i32) {
    %c0_i32 = arith.constant 0 : i32
    %c0_i32_0 = arith.constant 0 : i32
    %c0_i32_1 = arith.constant 0 : i32
    return %c0_i32, %c0_i32_0 : i32, i32
  }
  func.func @transform_6(%arg0: i32) -> (i32, i32) {
    %c0_i32 = arith.constant 0 : i32
    %c0_i32_0 = arith.constant 0 : i32
    %c0_i32_1 = arith.constant 0 : i32
    return %c0_i32, %c0_i32_0 : i32, i32
  }
}

</mosaic_0001>

<llo_original>
// kernel: tpu_custom_call.1
$region0: #{tpu_custom_call.1}
  #allocation0 [shape = 'u32[]', space=smem, size = 0x4, offset = 0x4, fixed_abs, tag = 'smem constant byte address 0x4 - core index']
  #allocation1 [shape = 'u32[72,128]{1,0:T(1,128)}', space=vmem, size = 0x9000, scoped, tag = 'internal scratch']
  %s0 = inlined_call_operand.vmem [shape: f32[8,326], index: 0, kind: input, shape index: {}]
  %s1 = inlined_call_operand.vmem [shape: bf16[16,72], index: 1, kind: input, shape index: {}]
  %s2 = inlined_call_operand.vmem [shape: f32[16,1], index: 2, kind: input, shape index: {}]
  %s3 = inlined_call_operand.hbm [shape: bf16[288,1369], index: 3, kind: input, shape index: {}]
  %s4 = inlined_call_operand.hbm [shape: bf16[16,256], index: 4, kind: input, shape index: {}]
  %s5 = inlined_call_operand.vmem [shape: f32[16,1], index: 5, kind: input, shape index: {}]
  %s6 = inlined_call_operand.hbm [shape: f32[16,1184], index: 6, kind: output, shape index: {}]
  %s7 = sld [smem:[#allocation0]]
  $region42: #{tpu_custom_call.1} parent=0
    _
  %s9 = ssub.s32 1, %s7
  %s10 = scalar_select 0, %s9, %s7
  $region1: #{tpu_custom_call.1} parent=0
    #allocation2 [shape = 'u8[811008]{0}', space=vmem, size = 0xc6000, scoped, tag = 'input window, operand 3, single buffered']
    #allocation3 [shape = 's32[1]{0}', space=sflag, size = 0x4, scoped, tag = 'scoped memory for tpu_custom_call.1']
    #allocation4 [shape = 's32[1]{0}', space=sflag, size = 0x4, scoped, tag = 'scoped memory for tpu_custom_call.1']
    #allocation5 [shape = 'u8[8192]{0}', space=vmem, size = 0x2000, scoped, tag = 'input window, operand 4, single buffered']
    #allocation6 [shape = 's32[1]{0}', space=sflag, size = 0x4, scoped, tag = 'scoped memory for tpu_custom_call.1']
    #allocation7 [shape = 'u8[81920]{0}', space=vmem, size = 0x14000, scoped, tag = 'output window, operand 0, single buffered']
    %11 = vsyncpa [#allocation3], 0
    %12 = vsyncpa [#allocation6], 0
    %13 = vsyncpa [#allocation4], 0
    // Predicated region
    $region2: #{tpu_custom_call.1} parent=1 // pred_check
      _
    $region3: #{tpu_custom_call.1} parent=1 // pred_check_branch
      %15 = sbr.rel (0) target = $region5
    $region4: #{tpu_custom_call.1} parent=1 // pred_region
      _
    $region5: #{tpu_custom_call.1} parent=1 // pred_fallthru
      _
    // Predicated region
    $region6: #{tpu_custom_call.1} parent=1 // pred_check
      _
    $region7: #{tpu_custom_call.1} parent=1 // pred_check_branch
      %17 = sbr.rel (0) target = $region9
    $region8: #{tpu_custom_call.1} parent=1 // pred_region
      _
    $region9: #{tpu_custom_call.1} parent=1 // pred_fallthru
      _
    // Predicated region
    $region10: #{tpu_custom_call.1} parent=1 // pred_check
      _
    $region11: #{tpu_custom_call.1} parent=1 // pred_check_branch
      %19 = sbr.rel (0) target = $region13
    $region12: #{tpu_custom_call.1} parent=1 // pred_region
      _
    $region13: #{tpu_custom_call.1} parent=1 // pred_fallthru
      _
    // Predicated region
    $region14: #{tpu_custom_call.1} parent=1 // pred_check
      _
    $region15: #{tpu_custom_call.1} parent=1 // pred_check_branch
      %21 = sbr.rel (0) target = $region17
    $region16: #{tpu_custom_call.1} parent=1 // pred_region
      %23 = vsyncadd [#allocation3], 0
      %s24 = sshll.u32 %s3, 4
      %s25 = int_to_ptr.hbm [resolvable:$true] %s24
      %s26 = sshll.u32 [#allocation2], 4
      %s27 = int_to_ptr.vmem [resolvable:$true] %s26
      %32 = dma.hbm_to_vmem [thread:$0]  %s25, 25344, %s27, [#allocation3], 704, 704, 44
    $region17: #{tpu_custom_call.1} parent=1 // pred_fallthru
      _
    // Predicated region
    $region18: #{tpu_custom_call.1} parent=1 // pred_check
      _
    $region19: #{tpu_custom_call.1} parent=1 // pred_check_branch
      %34 = sbr.rel (0) target = $region21
    $region20: #{tpu_custom_call.1} parent=1 // pred_region
      %36 = vsyncadd [#allocation6], 0
      %s37 = sshll.u32 %s4, 4
      %s38 = int_to_ptr.hbm [resolvable:$true] %s37
      %s39 = sshll.u32 [#allocation5], 4
      %s40 = int_to_ptr.vmem [resolvable:$true] %s39
      %45 = dma.hbm_to_vmem [thread:$0]  %s38, 256, %s40, [#allocation6], 128, 128, 8
    $region21: #{tpu_custom_call.1} parent=1 // pred_fallthru
      _
    // Predicated region
    $region22: #{tpu_custom_call.1} parent=1 // pred_check
      _
    $region23: #{tpu_custom_call.1} parent=1 // pred_check_branch
      %47 = sbr.rel (0) target = $region25
    $region24: #{tpu_custom_call.1} parent=1 // pred_region
      _
    $region25: #{tpu_custom_call.1} parent=1 // pred_fallthru
      _
    // Predicated region
    $region26: #{tpu_custom_call.1} parent=1 // pred_check
      _
    $region27: #{tpu_custom_call.1} parent=1 // pred_check_branch
      %49 = sbr.rel (0) target = $region29
    $region28: #{tpu_custom_call.1} parent=1 // pred_region
      %51 = dma.done [#allocation3], 25344
    $region29: #{tpu_custom_call.1} parent=1 // pred_fallthru
      _
    // Predicated region
    $region30: #{tpu_custom_call.1} parent=1 // pred_check
      _
    $region31: #{tpu_custom_call.1} parent=1 // pred_check_branch
      %53 = sbr.rel (0) target = $region33
    $region32: #{tpu_custom_call.1} parent=1 // pred_region
      %55 = dma.done [#allocation6], 256
    $region33: #{tpu_custom_call.1} parent=1 // pred_fallthru
      _
    %v57 = vld [vmem:[%s0] sm:$0xff]
    %v58 = vld [vmem:[%s0 + $0x8] sm:$0xff]
    %v59 = vld [vmem:[%s0 + $0x10] sm:$0xff]
    %63 = vrot.lane.b32.xlu0 %v57, 127
    %v64 = vpop.permute.xlu0 %63
    %65 = vrot.lane.b32.xlu0 %v58, 127
    %v66 = vpop.permute.xlu0 %65
    %67 = vrot.lane.b32.xlu0 %v59, 127
    %v68 = vpop.permute.xlu0 %67
    %vm69 = vcmask 1039360
    %v70 = vsel %vm69, %v64, %v66
    %v71 = vsel %vm69, %v66, %v68
    %75 = vrot.lane.b32.xlu0 %v57, 126
    %v76 = vpop.permute.xlu0 %75
    %77 = vrot.lane.b32.xlu0 %v58, 126
    %v78 = vpop.permute.xlu0 %77
    %79 = vrot.lane.b32.xlu0 %v59, 126
    %v80 = vpop.permute.xlu0 %79
    %vm81 = vcmask 1031168
    %v82 = vsel %vm81, %v76, %v78
    %v83 = vsel %vm81, %v78, %v80
    %87 = vrot.lane.b32.xlu0 %v57, 110
    %v88 = vpop.permute.xlu0 %87
    %89 = vrot.lane.b32.xlu0 %v58, 110
    %v90 = vpop.permute.xlu0 %89
    %91 = vrot.lane.b32.xlu0 %v59, 110
    %v92 = vpop.permute.xlu0 %91
    %vm93 = vcmask 900096
    %v94 = vsel %vm93, %v88, %v90
    %v95 = vsel %vm93, %v90, %v92
    %99 = vrot.lane.b32.xlu0 %v57, 109
    %v100 = vpop.permute.xlu0 %99
    %101 = vrot.lane.b32.xlu0 %v58, 109
    %v102 = vpop.permute.xlu0 %101
    %103 = vrot.lane.b32.xlu0 %v59, 109
    %v104 = vpop.permute.xlu0 %103
    %vm105 = vcmask 891904
    %v106 = vsel %vm105, %v100, %v102
    %v107 = vsel %vm105, %v102, %v104
    %111 = vrot.lane.b32.xlu0 %v57, 108
    %v112 = vpop.permute.xlu0 %111
    %113 = vrot.lane.b32.xlu0 %v58, 108
    %v114 = vpop.permute.xlu0 %113
    %115 = vrot.lane.b32.xlu0 %v59, 108
    %v116 = vpop.permute.xlu0 %115
    %vm117 = vcmask 883712
    %v118 = vsel %vm117, %v112, %v114
    %v119 = vsel %vm117, %v114, %v116
    %123 = vrot.lane.b32.xlu0 %v57, 92
    %v124 = vpop.permute.xlu0 %123
    %125 = vrot.lane.b32.xlu0 %v58, 92
    %v126 = vpop.permute.xlu0 %125
    %127 = vrot.lane.b32.xlu0 %v59, 92
    %v128 = vpop.permute.xlu0 %127
    %vm129 = vcmask 752640
    %v130 = vsel %vm129, %v124, %v126
    %v131 = vsel %vm129, %v126, %v128
    %135 = vrot.lane.b32.xlu0 %v57, 91
    %v136 = vpop.permute.xlu0 %135
    %137 = vrot.lane.b32.xlu0 %v58, 91
    %v138 = vpop.permute.xlu0 %137
    %139 = vrot.lane.b32.xlu0 %v59, 91
    %v140 = vpop.permute.xlu0 %139
    %vm141 = vcmask 744448
    %v142 = vsel %vm141, %v136, %v138
    %v143 = vsel %vm141, %v138, %v140
    %147 = vrot.lane.b32.xlu0 %v57, 90
    %v148 = vpop.permute.xlu0 %147
    %149 = vrot.lane.b32.xlu0 %v58, 90
    %v150 = vpop.permute.xlu0 %149
    %151 = vrot.lane.b32.xlu0 %v59, 90
    %v152 = vpop.permute.xlu0 %151
    %vm153 = vcmask 736256
    %v154 = vsel %vm153, %v148, %v150
    %v155 = vsel %vm153, %v150, %v152
    %v159 = vld [vmem:[%s1] sm:$0xf]
    %v160 = vld [vmem:[%s1 + $0x4] sm:$0xf]
    %v161 = vpack.c.bf16 %v70, %v57
    %v162 = vpack.c.bf16 %v71, %v58
    %v163 = vpack.c.bf16 %v68, %v59
    %v164 = vpack.c.bf16 %v94, %v82
    %v165 = vpack.c.bf16 %v95, %v83
    %v166 = vpack.c.bf16 %v92, %v80
    %v167 = vpack.c.bf16 %v118, %v106
    %v168 = vpack.c.bf16 %v119, %v107
    %v169 = vpack.c.bf16 %v116, %v104
    %v170 = vpack.c.bf16 %v142, %v130
    %v171 = vpack.c.bf16 %v143, %v131
    %v172 = vpack.c.bf16 %v140, %v128
    %v173 = vpack.c.bf16 %v154, %v154
    %v174 = vpack.c.bf16 %v155, %v155
    %v175 = vpack.c.bf16 %v152, %v152
    %v176 = vld [vmem:[%s2] sm:$0xff]
    %v177 = vld [vmem:[%s2 + $0x8] sm:$0xff]
    %179 = vset.pattern.permute.xlu0 0
    %180 = vperm.xlu0 %179, %v176
    %v181 = vpop.permute.xlu0 %180
    %184 = vset.pattern.permute.xlu0 0
    %185 = vperm.xlu0 %184, %v177
    %v186 = vpop.permute.xlu0 %185
    %v190 = vunpack.c.l.b16 %v159
    %v191 = vunpack.c.l.b16 %v160
    %v192 = vpack.c.b16 %v191, %v190
    %vm193 = vcmask 588800
    %v195 = vsel %vm193, %v192, 0
    %vm197 = vcmask 1043456
    %v199 = vsel %vm197, %v173, 0
    %v202 = vsel %vm197, %v174, 0
    %v205 = vsel %vm197, %v175, 0
    %207 = vmatpush.bf16.msra.mxu0 0
    %208 = vmatpush.bf16.msra.mxu0 0
    %209 = vmatpush.bf16.msra.mxu0 0
    %210 = vmatpush.bf16.msra.mxu0 %v199
    %211 = vmatpush.bf16.msra.mxu0 %v170
    %212 = vmatpush.bf16.msra.mxu0 %v167
    %213 = vmatpush.bf16.msra.mxu0 %v164
    %214 = vmatpush.bf16.msra.mxu0 %v161
    %215 = vmatmul.bf16.gmra.mxu0 %v195
    %v216 = vpop.f32.mrf.mxu0
    %v217 = vadd.f32 %v181, %v216
    %v218 = vpop.f32.mrf.mxu0
    %v219 = vadd.f32 %v186, %v218
    %220 = vdwg.mxu0
    %221 = vmatpush.bf16.msra.mxu0 0
    %222 = vmatpush.bf16.msra.mxu0 0
    %223 = vmatpush.bf16.msra.mxu0 0
    %224 = vmatpush.bf16.msra.mxu0 %v202
    %225 = vmatpush.bf16.msra.mxu0 %v171
    %226 = vmatpush.bf16.msra.mxu0 %v168
    %227 = vmatpush.bf16.msra.mxu0 %v165
    %228 = vmatpush.bf16.msra.mxu0 %v162
    %229 = vmatmul.bf16.gmra.mxu0 %v195
    %v230 = vpop.f32.mrf.mxu0
    %v231 = vadd.f32 %v181, %v230
    %v232 = vpop.f32.mrf.mxu0
    %v233 = vadd.f32 %v186, %v232
    %234 = vdwg.mxu0
    %235 = vmatpush.bf16.msra.mxu0 0
    %236 = vmatpush.bf16.msra.mxu0 0
    %237 = vmatpush.bf16.msra.mxu0 0
    %238 = vmatpush.bf16.msra.mxu0 %v205
    %239 = vmatpush.bf16.msra.mxu0 %v172
    %240 = vmatpush.bf16.msra.mxu0 %v169
    %241 = vmatpush.bf16.msra.mxu0 %v166
    %242 = vmatpush.bf16.msra.mxu0 %v163
    %243 = vmatmul.bf16.gmra.mxu0 %v195
    %v244 = vpop.f32.mrf.mxu0
    %v245 = vadd.f32 %v181, %v244
    %v246 = vpop.f32.mrf.mxu0
    %v247 = vadd.f32 %v186, %v246
    %248 = vdwg.mxu0
    %v249 = vpack.c.bf16 %v219, %v217
    %v250 = vpack.c.bf16 %v233, %v231
    %v251 = vpack.c.bf16 %v247, %v245
    %v252 = vld [vmem:[#allocation2] sm:$0xff]
    %v253 = vld [vmem:[#allocation2 + $0x8] sm:$0xff]
    %v254 = vld [vmem:[#allocation2 + $0x10] sm:$0xff]
    %v255 = vld [vmem:[#allocation2 + $0x18] sm:$0xff]
    %v256 = vld [vmem:[#allocation2 + $0x20] sm:$0xff]
    %v257 = vld [vmem:[#allocation2 + $0x28] sm:$0xf]
    %v258 = vld [vmem:[#allocation2 + $0x2c] sm:$0xff]
    %v259 = vld [vmem:[#allocation2 + $0x34] sm:$0xff]
    %v260 = vld [vmem:[#allocation2 + $0x3c] sm:$0xff]
    %v261 = vld [vmem:[#allocation2 + $0x44] sm:$0xff]
    %v262 = vld [vmem:[#allocation2 + $0x4c] sm:$0xff]
    %v263 = vld [vmem:[#allocation2 + $0x54] sm:$0xf]
    %v264 = vld [vmem:[#allocation2 + $0x58] sm:$0xff]
    %v265 = vld [vmem:[#allocation2 + $0x60] sm:$0xff]
    %v266 = vld [vmem:[#allocation2 + $0x68] sm:$0xff]
    %v267 = vld [vmem:[#allocation2 + $0x70] sm:$0xff]
    %v268 = vld [vmem:[#allocation2 + $0x78] sm:$0xff]
    %v269 = vld [vmem:[#allocation2 + $0x80] sm:$0xf]
    %v270 = vld [vmem:[#allocation2 + $0x84] sm:$0xff]
    %v271 = vld [vmem:[#allocation2 + $0x8c] sm:$0xff]
    %v272 = vld [vmem:[#allocation2 + $0x94] sm:$0xff]
    %v273 = vld [vmem:[#allocation2 + $0x9c] sm:$0xff]
    %v274 = vld [vmem:[#allocation2 + $0xa4] sm:$0xff]
    %v275 = vld [vmem:[#allocation2 + $0xac] sm:$0xf]
    %v276 = vld [vmem:[#allocation2 + $0xb0] sm:$0xff]
    %v277 = vld [vmem:[#allocation2 + $0xb8] sm:$0xff]
    %v278 = vld [vmem:[#allocation2 + $0xc0] sm:$0xff]
    %v279 = vld [vmem:[#allocation2 + $0xc8] sm:$0xff]
    %v280 = vld [vmem:[#allocation2 + $0xd0] sm:$0xff]
    %v281 = vld [vmem:[#allocation2 + $0xd8] sm:$0xf]
    %v282 = vld [vmem:[#allocation2 + $0xdc] sm:$0xff]
    %v283 = vld [vmem:[#allocation2 + $0xe4] sm:$0xff]
    %v284 = vld [vmem:[#allocation2 + $0xec] sm:$0xff]
    %v285 = vld [vmem:[#allocation2 + $0xf4] sm:$0xff]
    %v286 = vld [vmem:[#allocation2 + $0xfc] sm:$0xff]
    %v287 = vld [vmem:[#allocation2 + $0x104] sm:$0xf]
    %v288 = vld [vmem:[#allocation2 + $0x108] sm:$0xff]
    %v289 = vld [vmem:[#allocation2 + $0x110] sm:$0xff]
    %v290 = vld [vmem:[#allocation2 + $0x118] sm:$0xff]
    %v291 = vld [vmem:[#allocation2 + $0x120] sm:$0xff]
    %v292 = vld [vmem:[#allocation2 + $0x128] sm:$0xff]
    %v293 = vld [vmem:[#allocation2 + $0x130] sm:$0xf]
    %v294 = vld [vmem:[#allocation2 + $0x134] sm:$0xff]
    %v295 = vld [vmem:[#allocation2 + $0x13c] sm:$0xff]
    %v296 = vld [vmem:[#allocation2 + $0x144] sm:$0xff]
    %v297 = vld [vmem:[#allocation2 + $0x14c] sm:$0xff]
    %v298 = vld [vmem:[#allocation2 + $0x154] sm:$0xff]
    %v299 = vld [vmem:[#allocation2 + $0x15c] sm:$0xf]
    %v300 = vld [vmem:[#allocation2 + $0x160] sm:$0xff]
    %v301 = vld [vmem:[#allocation2 + $0x168] sm:$0xff]
    %v302 = vld [vmem:[#allocation2 + $0x170] sm:$0xff]
    %v303 = vld [vmem:[#allocation2 + $0x178] sm:$0xff]
    %v304 = vld [vmem:[#allocation2 + $0x180] sm:$0xff]
    %v305 = vld [vmem:[#allocation2 + $0x188] sm:$0xf]
    %v306 = vld [vmem:[#allocation2 + $0x18c] sm:$0xff]
    %v307 = vld [vmem:[#allocation2 + $0x194] sm:$0xff]
    %v308 = vld [vmem:[#allocation2 + $0x19c] sm:$0xff]
    %v309 = vld [vmem:[#allocation2 + $0x1a4] sm:$0xff]
    %v310 = vld [vmem:[#allocation2 + $0x1ac] sm:$0xff]
    %v311 = vld [vmem:[#allocation2 + $0x1b4] sm:$0xf]
    %v312 = vld [vmem:[#allocation2 + $0x1b8] sm:$0xff]
    %v313 = vld [vmem:[#allocation2 + $0x1c0] sm:$0xff]
    %v314 = vld [vmem:[#allocation2 + $0x1c8] sm:$0xff]
    %v315 = vld [vmem:[#allocation2 + $0x1d0] sm:$0xff]
    %v316 = vld [vmem:[#allocation2 + $0x1d8] sm:$0xff]
    %v317 = vld [vmem:[#allocation2 + $0x1e0] sm:$0xf]
    %v318 = vld [vmem:[#allocation2 + $0x1e4] sm:$0xff]
    %v319 = vld [vmem:[#allocation2 + $0x1ec] sm:$0xff]
    %v320 = vld [vmem:[#allocation2 + $0x1f4] sm:$0xff]
    %v321 = vld [vmem:[#allocation2 + $0x1fc] sm:$0xff]
    %v322 = vld [vmem:[#allocation2 + $0x204] sm:$0xff]
    %v323 = vld [vmem:[#allocation2 + $0x20c] sm:$0xf]
    %v324 = vld [vmem:[#allocation2 + $0x210] sm:$0xff]
    %v325 = vld [vmem:[#allocation2 + $0x218] sm:$0xff]
    %v326 = vld [vmem:[#allocation2 + $0x220] sm:$0xff]
    %v327 = vld [vmem:[#allocation2 + $0x228] sm:$0xff]
    %v328 = vld [vmem:[#allocation2 + $0x230] sm:$0xff]
    %v329 = vld [vmem:[#allocation2 + $0x238] sm:$0xf]
    %v330 = vld [vmem:[#allocation2 + $0x23c] sm:$0xff]
    %v331 = vld [vmem:[#allocation2 + $0x244] sm:$0xff]
    %v332 = vld [vmem:[#allocation2 + $0x24c] sm:$0xff]
    %v333 = vld [vmem:[#allocation2 + $0x254] sm:$0xff]
    %v334 = vld [vmem:[#allocation2 + $0x25c] sm:$0xff]
    %v335 = vld [vmem:[#allocation2 + $0x264] sm:$0xf]
    %v336 = vld [vmem:[#allocation2 + $0x268] sm:$0xff]
    %v337 = vld [vmem:[#allocation2 + $0x270] sm:$0xff]
    %v338 = vld [vmem:[#allocation2 + $0x278] sm:$0xff]
    %v339 = vld [vmem:[#allocation2 + $0x280] sm:$0xff]
    %v340 = vld [vmem:[#allocation2 + $0x288] sm:$0xff]
    %v341 = vld [vmem:[#allocation2 + $0x290] sm:$0xf]
    %v342 = vld [vmem:[#allocation2 + $0x294] sm:$0xff]
    %v343 = vld [vmem:[#allocation2 + $0x29c] sm:$0xff]
    %v344 = vld [vmem:[#allocation2 + $0x2a4] sm:$0xff]
    %v345 = vld [vmem:[#allocation2 + $0x2ac] sm:$0xff]
    %v346 = vld [vmem:[#allocation2 + $0x2b4] sm:$0xff]
    %v347 = vld [vmem:[#allocation2 + $0x2bc] sm:$0xf]
    %v348 = vld [vmem:[#allocation2 + $0x2c0] sm:$0xff]
    %v349 = vld [vmem:[#allocation2 + $0x2c8] sm:$0xff]
    %v350 = vld [vmem:[#allocation2 + $0x2d0] sm:$0xff]
    %v351 = vld [vmem:[#allocation2 + $0x2d8] sm:$0xff]
    %v352 = vld [vmem:[#allocation2 + $0x2e0] sm:$0xff]
    %v353 = vld [vmem:[#allocation2 + $0x2e8] sm:$0xf]
    %v354 = vld [vmem:[#allocation2 + $0x2ec] sm:$0xff]
    %v355 = vld [vmem:[#allocation2 + $0x2f4] sm:$0xff]
    %v356 = vld [vmem:[#allocation2 + $0x2fc] sm:$0xff]
    %v357 = vld [vmem:[#allocation2 + $0x304] sm:$0xff]
    %v358 = vld [vmem:[#allocation2 + $0x30c] sm:$0xff]
    %v359 = vld [vmem:[#allocation2 + $0x314] sm:$0xf]
    %v360 = vld [vmem:[#allocation2 + $0x318] sm:$0xff]
    %v361 = vld [vmem:[#allocation2 + $0x320] sm:$0xff]
    %v362 = vld [vmem:[#allocation2 + $0x328] sm:$0xff]
    %v363 = vld [vmem:[#allocation2 + $0x330] sm:$0xff]
    %v364 = vld [vmem:[#allocation2 + $0x338] sm:$0xff]
    %v365 = vld [vmem:[#allocation2 + $0x340] sm:$0xf]
    %v366 = vld [vmem:[#allocation2 + $0x344] sm:$0xff]
    %v367 = vld [vmem:[#allocation2 + $0x34c] sm:$0xff]
    %v368 = vld [vmem:[#allocation2 + $0x354] sm:$0xff]
    %v369 = vld [vmem:[#allocation2 + $0x35c] sm:$0xff]
    %v370 = vld [vmem:[#allocation2 + $0x364] sm:$0xff]
    %v371 = vld [vmem:[#allocation2 + $0x36c] sm:$0xf]
    %v372 = vld [vmem:[#allocation2 + $0x370] sm:$0xff]
    %v373 = vld [vmem:[#allocation2 + $0x378] sm:$0xff]
    %v374 = vld [vmem:[#allocation2 + $0x380] sm:$0xff]
    %v375 = vld [vmem:[#allocation2 + $0x388] sm:$0xff]
    %v376 = vld [vmem:[#allocation2 + $0x390] sm:$0xff]
    %v377 = vld [vmem:[#allocation2 + $0x398] sm:$0xf]
    %v378 = vld [vmem:[#allocation2 + $0x39c] sm:$0xff]
    %v379 = vld [vmem:[#allocation2 + $0x3a4] sm:$0xff]
    %v380 = vld [vmem:[#allocation2 + $0x3ac] sm:$0xff]
    %v381 = vld [vmem:[#allocation2 + $0x3b4] sm:$0xff]
    %v382 = vld [vmem:[#allocation2 + $0x3bc] sm:$0xff]
    %v383 = vld [vmem:[#allocation2 + $0x3c4] sm:$0xf]
    %v384 = vld [vmem:[#allocation2 + $0x3c8] sm:$0xff]
    %v385 = vld [vmem:[#allocation2 + $0x3d0] sm:$0xff]
    %v386 = vld [vmem:[#allocation2 + $0x3d8] sm:$0xff]
    %v387 = vld [vmem:[#allocation2 + $0x3e0] sm:$0xff]
    %v388 = vld [vmem:[#allocation2 + $0x3e8] sm:$0xff]
    %v389 = vld [vmem:[#allocation2 + $0x3f0] sm:$0xf]
    %v390 = vld [vmem:[#allocation2 + $0x3f4] sm:$0xff]
    %v391 = vld [vmem:[#allocation2 + $0x3fc] sm:$0xff]
    %v392 = vld [vmem:[#allocation2 + $0x404] sm:$0xff]
    %v393 = vld [vmem:[#allocation2 + $0x40c] sm:$0xff]
    %v394 = vld [vmem:[#allocation2 + $0x414] sm:$0xff]
    %v395 = vld [vmem:[#allocation2 + $0x41c] sm:$0xf]
    %v396 = vld [vmem:[#allocation2 + $0x420] sm:$0xff]
    %v397 = vld [vmem:[#allocation2 + $0x428] sm:$0xff]
    %v398 = vld [vmem:[#allocation2 + $0x430] sm:$0xff]
    %v399 = vld [vmem:[#allocation2 + $0x438] sm:$0xff]
    %v400 = vld [vmem:[#allocation2 + $0x440] sm:$0xff]
    %v401 = vld [vmem:[#allocation2 + $0x448] sm:$0xf]
    %v402 = vld [vmem:[#allocation2 + $0x44c] sm:$0xff]
    %v403 = vld [vmem:[#allocation2 + $0x454] sm:$0xff]
    %v404 = vld [vmem:[#allocation2 + $0x45c] sm:$0xff]
    %v405 = vld [vmem:[#allocation2 + $0x464] sm:$0xff]
    %v406 = vld [vmem:[#allocation2 + $0x46c] sm:$0xff]
    %v407 = vld [vmem:[#allocation2 + $0x474] sm:$0xf]
    %v408 = vld [vmem:[#allocation2 + $0x478] sm:$0xff]
    %v409 = vld [vmem:[#allocation2 + $0x480] sm:$0xff]
    %v410 = vld [vmem:[#allocation2 + $0x488] sm:$0xff]
    %v411 = vld [vmem:[#allocation2 + $0x490] sm:$0xff]
    %v412 = vld [vmem:[#allocation2 + $0x498] sm:$0xff]
    %v413 = vld [vmem:[#allocation2 + $0x4a0] sm:$0xf]
    %v414 = vld [vmem:[#allocation2 + $0x4a4] sm:$0xff]
    %v415 = vld [vmem:[#allocation2 + $0x4ac] sm:$0xff]
    %v416 = vld [vmem:[#allocation2 + $0x4b4] sm:$0xff]
    %v417 = vld [vmem:[#allocation2 + $0x4bc] sm:$0xff]
    %v418 = vld [vmem:[#allocation2 + $0x4c4] sm:$0xff]
    %v419 = vld [vmem:[#allocation2 + $0x4cc] sm:$0xf]
    %v420 = vld [vmem:[#allocation2 + $0x4d0] sm:$0xff]
    %v421 = vld [vmem:[#allocation2 + $0x4d8] sm:$0xff]
    %v422 = vld [vmem:[#allocation2 + $0x4e0] sm:$0xff]
    %v423 = vld [vmem:[#allocation2 + $0x4e8] sm:$0xff]
    %v424 = vld [vmem:[#allocation2 + $0x4f0] sm:$0xff]
    %v425 = vld [vmem:[#allocation2 + $0x4f8] sm:$0xf]
    %v426 = vld [vmem:[#allocation2 + $0x4fc] sm:$0xff]
    %v427 = vld [vmem:[#allocation2 + $0x504] sm:$0xff]
    %v428 = vld [vmem:[#allocation2 + $0x50c] sm:$0xff]
    %v429 = vld [vmem:[#allocation2 + $0x514] sm:$0xff]
    %v430 = vld [vmem:[#allocation2 + $0x51c] sm:$0xff]
    %v431 = vld [vmem:[#allocation2 + $0x524] sm:$0xf]
    %v432 = vld [vmem:[#allocation2 + $0x528] sm:$0xff]
    %v433 = vld [vmem:[#allocation2 + $0x530] sm:$0xff]
    %v434 = vld [vmem:[#allocation2 + $0x538] sm:$0xff]
    %v435 = vld [vmem:[#allocation2 + $0x540] sm:$0xff]
    %v436 = vld [vmem:[#allocation2 + $0x548] sm:$0xff]
    %v437 = vld [vmem:[#allocation2 + $0x550] sm:$0xf]
    %v438 = vld [vmem:[#allocation2 + $0x554] sm:$0xff]
    %v439 = vld [vmem:[#allocation2 + $0x55c] sm:$0xff]
    %v440 = vld [vmem:[#allocation2 + $0x564] sm:$0xff]
    %v441 = vld [vmem:[#allocation2 + $0x56c] sm:$0xff]
    %v442 = vld [vmem:[#allocation2 + $0x574] sm:$0xff]
    %v443 = vld [vmem:[#allocation2 + $0x57c] sm:$0xf]
    %v444 = vld [vmem:[#allocation2 + $0x580] sm:$0xff]
    %v445 = vld [vmem:[#allocation2 + $0x588] sm:$0xff]
    %v446 = vld [vmem:[#allocation2 + $0x590] sm:$0xff]
    %v447 = vld [vmem:[#allocation2 + $0x598] sm:$0xff]
    %v448 = vld [vmem:[#allocation2 + $0x5a0] sm:$0xff]
    %v449 = vld [vmem:[#allocation2 + $0x5a8] sm:$0xf]
    %v450 = vld [vmem:[#allocation2 + $0x5ac] sm:$0xff]
    %v451 = vld [vmem:[#allocation2 + $0x5b4] sm:$0xff]
    %v452 = vld [vmem:[#allocation2 + $0x5bc] sm:$0xff]
    %v453 = vld [vmem:[#allocation2 + $0x5c4] sm:$0xff]
    %v454 = vld [vmem:[#allocation2 + $0x5cc] sm:$0xff]
    %v455 = vld [vmem:[#allocation2 + $0x5d4] sm:$0xf]
    %v456 = vld [vmem:[#allocation2 + $0x5d8] sm:$0xff]
    %v457 = vld [vmem:[#allocation2 + $0x5e0] sm:$0xff]
    %v458 = vld [vmem:[#allocation2 + $0x5e8] sm:$0xff]
    %v459 = vld [vmem:[#allocation2 + $0x5f0] sm:$0xff]
    %v460 = vld [vmem:[#allocation2 + $0x5f8] sm:$0xff]
    %v461 = vld [vmem:[#allocation2 + $0x600] sm:$0xf]
    %v462 = vld [vmem:[#allocation2 + $0x604] sm:$0xff]
    %v463 = vld [vmem:[#allocation2 + $0x60c] sm:$0xff]
    %v464 = vld [vmem:[#allocation2 + $0x614] sm:$0xff]
    %v465 = vld [vmem:[#allocation2 + $0x61c] sm:$0xff]
    %v466 = vld [vmem:[#allocation2 + $0x624] sm:$0xff]
    %v467 = vld [vmem:[#allocation2 + $0x62c] sm:$0xf]
    %v684 = vunpack.c.l.b16 %v252
    %v685 = vunpack.c.h.b16 %v252
    %v686 = vunpack.c.l.b16 %v253
    %v687 = vunpack.c.h.b16 %v253
    %v688 = vunpack.c.l.b16 %v254
    %v689 = vunpack.c.h.b16 %v254
    %v690 = vunpack.c.l.b16 %v255
    %v691 = vunpack.c.h.b16 %v255
    %v692 = vunpack.c.l.b16 %v256
    %v693 = vunpack.c.h.b16 %v256
    %v694 = vunpack.c.l.b16 %v257
    %v695 = vunpack.c.l.b16 %v258
    %v696 = vunpack.c.h.b16 %v258
    %v697 = vunpack.c.l.b16 %v259
    %v698 = vunpack.c.h.b16 %v259
    %v699 = vunpack.c.l.b16 %v260
    %v700 = vunpack.c.h.b16 %v260
    %v701 = vunpack.c.l.b16 %v261
    %v702 = vunpack.c.h.b16 %v261
    %v703 = vunpack.c.l.b16 %v262
    %v704 = vunpack.c.h.b16 %v262
    %v705 = vunpack.c.l.b16 %v263
    %v706 = vunpack.c.l.b16 %v264
    %v707 = vunpack.c.h.b16 %v264
    %v708 = vunpack.c.l.b16 %v265
    %v709 = vunpack.c.h.b16 %v265
    %v710 = vunpack.c.l.b16 %v266
    %v711 = vunpack.c.h.b16 %v266
    %v712 = vunpack.c.l.b16 %v267
    %v713 = vunpack.c.h.b16 %v267
    %v714 = vunpack.c.l.b16 %v268
    %v715 = vunpack.c.h.b16 %v268
    %v716 = vunpack.c.l.b16 %v269
    %v717 = vunpack.c.l.b16 %v270
    %v718 = vunpack.c.h.b16 %v270
    %v719 = vunpack.c.l.b16 %v271
    %v720 = vunpack.c.h.b16 %v271
    %v721 = vunpack.c.l.b16 %v272
    %v722 = vunpack.c.h.b16 %v272
    %v723 = vunpack.c.l.b16 %v273
    %v724 = vunpack.c.h.b16 %v273
    %v725 = vunpack.c.l.b16 %v274
    %v726 = vunpack.c.h.b16 %v274
    %v727 = vunpack.c.l.b16 %v275
    %v728 = vunpack.c.l.b16 %v276
    %v729 = vunpack.c.h.b16 %v276
    %v730 = vunpack.c.l.b16 %v277
    %v731 = vunpack.c.h.b16 %v277
    %v732 = vunpack.c.l.b16 %v278
    %v733 = vunpack.c.h.b16 %v278
    %v734 = vunpack.c.l.b16 %v279
    %v735 = vunpack.c.h.b16 %v279
    %v736 = vunpack.c.l.b16 %v280
    %v737 = vunpack.c.h.b16 %v280
    %v738 = vunpack.c.l.b16 %v281
    %v739 = vunpack.c.l.b16 %v282
    %v740 = vunpack.c.h.b16 %v282
    %v741 = vunpack.c.l.b16 %v283
    %v742 = vunpack.c.h.b16 %v283
    %v743 = vunpack.c.l.b16 %v284
    %v744 = vunpack.c.h.b16 %v284
    %v745 = vunpack.c.l.b16 %v285
    %v746 = vunpack.c.h.b16 %v285
    %v747 = vunpack.c.l.b16 %v286
    %v748 = vunpack.c.h.b16 %v286
    %v749 = vunpack.c.l.b16 %v287
    %v750 = vunpack.c.l.b16 %v288
    %v751 = vunpack.c.h.b16 %v288
    %v752 = vunpack.c.l.b16 %v289
    %v753 = vunpack.c.h.b16 %v289
    %v754 = vunpack.c.l.b16 %v290
    %v755 = vunpack.c.h.b16 %v290
    %v756 = vunpack.c.l.b16 %v291
    %v757 = vunpack.c.h.b16 %v291
    %v758 = vunpack.c.l.b16 %v292
    %v759 = vunpack.c.h.b16 %v292
    %v760 = vunpack.c.l.b16 %v293
    %v761 = vunpack.c.l.b16 %v294
    %v762 = vunpack.c.h.b16 %v294
    %v763 = vunpack.c.l.b16 %v295
    %v764 = vunpack.c.h.b16 %v295
    %v765 = vunpack.c.l.b16 %v296
    %v766 = vunpack.c.h.b16 %v296
    %v767 = vunpack.c.l.b16 %v297
    %v768 = vunpack.c.h.b16 %v297
    %v769 = vunpack.c.l.b16 %v298
    %v770 = vunpack.c.h.b16 %v298
    %v771 = vunpack.c.l.b16 %v299
    %v772 = vunpack.c.l.b16 %v300
    %v773 = vunpack.c.h.b16 %v300
    %v774 = vunpack.c.l.b16 %v301
    %v775 = vunpack.c.h.b16 %v301
    %v776 = vunpack.c.l.b16 %v302
    %v777 = vunpack.c.h.b16 %v302
    %v778 = vunpack.c.l.b16 %v303
    %v779 = vunpack.c.h.b16 %v303
    %v780 = vunpack.c.l.b16 %v304
    %v781 = vunpack.c.h.b16 %v304
    %v782 = vunpack.c.l.b16 %v305
    %v783 = vunpack.c.l.b16 %v306
    %v784 = vunpack.c.h.b16 %v306
    %v785 = vunpack.c.l.b16 %v307
    %v786 = vunpack.c.h.b16 %v307
    %v787 = vunpack.c.l.b16 %v308
    %v788 = vunpack.c.h.b16 %v308
    %v789 = vunpack.c.l.b16 %v309
    %v790 = vunpack.c.h.b16 %v309
    %v791 = vunpack.c.l.b16 %v310
    %v792 = vunpack.c.h.b16 %v310
    %v793 = vunpack.c.l.b16 %v311
    %v794 = vunpack.c.l.b16 %v312
    %v795 = vunpack.c.h.b16 %v312
    %v796 = vunpack.c.l.b16 %v313
    %v797 = vunpack.c.h.b16 %v313
    %v798 = vunpack.c.l.b16 %v314
    %v799 = vunpack.c.h.b16 %v314
    %v800 = vunpack.c.l.b16 %v315
    %v801 = vunpack.c.h.b16 %v315
    %v802 = vunpack.c.l.b16 %v316
    %v803 = vunpack.c.h.b16 %v316
    %v804 = vunpack.c.l.b16 %v317
    %v805 = vunpack.c.l.b16 %v318
    %v806 = vunpack.c.h.b16 %v318
    %v807 = vunpack.c.l.b16 %v319
    %v808 = vunpack.c.h.b16 %v319
    %v809 = vunpack.c.l.b16 %v320
    %v810 = vunpack.c.h.b16 %v320
    %v811 = vunpack.c.l.b16 %v321
    %v812 = vunpack.c.h.b16 %v321
    %v813 = vunpack.c.l.b16 %v322
    %v814 = vunpack.c.h.b16 %v322
    %v815 = vunpack.c.l.b16 %v323
    %v816 = vunpack.c.l.b16 %v324
    %v817 = vunpack.c.h.b16 %v324
    %v818 = vunpack.c.l.b16 %v325
    %v819 = vunpack.c.h.b16 %v325
    %v820 = vunpack.c.l.b16 %v326
    %v821 = vunpack.c.h.b16 %v326
    %v822 = vunpack.c.l.b16 %v327
    %v823 = vunpack.c.h.b16 %v327
    %v824 = vunpack.c.l.b16 %v328
    %v825 = vunpack.c.h.b16 %v328
    %v826 = vunpack.c.l.b16 %v329
    %v827 = vunpack.c.l.b16 %v330
    %v828 = vunpack.c.h.b16 %v330
    %v829 = vunpack.c.l.b16 %v331
    %v830 = vunpack.c.h.b16 %v331
    %v831 = vunpack.c.l.b16 %v332
    %v832 = vunpack.c.h.b16 %v332
    %v833 = vunpack.c.l.b16 %v333
    %v834 = vunpack.c.h.b16 %v333
    %v835 = vunpack.c.l.b16 %v334
    %v836 = vunpack.c.h.b16 %v334
    %v837 = vunpack.c.l.b16 %v335
    %v838 = vunpack.c.l.b16 %v336
    %v839 = vunpack.c.h.b16 %v336
    %v840 = vunpack.c.l.b16 %v337
    %v841 = vunpack.c.h.b16 %v337
    %v842 = vunpack.c.l.b16 %v338
    %v843 = vunpack.c.h.b16 %v338
    %v844 = vunpack.c.l.b16 %v339
    %v845 = vunpack.c.h.b16 %v339
    %v846 = vunpack.c.l.b16 %v340
    %v847 = vunpack.c.h.b16 %v340
    %v848 = vunpack.c.l.b16 %v341
    %v849 = vunpack.c.l.b16 %v342
    %v850 = vunpack.c.h.b16 %v342
    %v851 = vunpack.c.l.b16 %v343
    %v852 = vunpack.c.h.b16 %v343
    %v853 = vunpack.c.l.b16 %v344
    %v854 = vunpack.c.h.b16 %v344
    %v855 = vunpack.c.l.b16 %v345
    %v856 = vunpack.c.h.b16 %v345
    %v857 = vunpack.c.l.b16 %v346
    %v858 = vunpack.c.h.b16 %v346
    %v859 = vunpack.c.l.b16 %v347
    %v860 = vunpack.c.l.b16 %v348
    %v861 = vunpack.c.h.b16 %v348
    %v862 = vunpack.c.l.b16 %v349
    %v863 = vunpack.c.h.b16 %v349
    %v864 = vunpack.c.l.b16 %v350
    %v865 = vunpack.c.h.b16 %v350
    %v866 = vunpack.c.l.b16 %v351
    %v867 = vunpack.c.h.b16 %v351
    %v868 = vunpack.c.l.b16 %v352
    %v869 = vunpack.c.h.b16 %v352
    %v870 = vunpack.c.l.b16 %v353
    %v871 = vunpack.c.l.b16 %v354
    %v872 = vunpack.c.h.b16 %v354
    %v873 = vunpack.c.l.b16 %v355
    %v874 = vunpack.c.h.b16 %v355
    %v875 = vunpack.c.l.b16 %v356
    %v876 = vunpack.c.h.b16 %v356
    %v877 = vunpack.c.l.b16 %v357
    %v878 = vunpack.c.h.b16 %v357
    %v879 = vunpack.c.l.b16 %v358
    %v880 = vunpack.c.h.b16 %v358
    %v881 = vunpack.c.l.b16 %v359
    %v882 = vunpack.c.l.b16 %v360
    %v883 = vunpack.c.h.b16 %v360
    %v884 = vunpack.c.l.b16 %v361
    %v885 = vunpack.c.h.b16 %v361
    %v886 = vunpack.c.l.b16 %v362
    %v887 = vunpack.c.h.b16 %v362
    %v888 = vunpack.c.l.b16 %v363
    %v889 = vunpack.c.h.b16 %v363
    %v890 = vunpack.c.l.b16 %v364
    %v891 = vunpack.c.h.b16 %v364
    %v892 = vunpack.c.l.b16 %v365
    %v893 = vunpack.c.l.b16 %v366
    %v894 = vunpack.c.h.b16 %v366
    %v895 = vunpack.c.l.b16 %v367
    %v896 = vunpack.c.h.b16 %v367
    %v897 = vunpack.c.l.b16 %v368
    %v898 = vunpack.c.h.b16 %v368
    %v899 = vunpack.c.l.b16 %v369
    %v900 = vunpack.c.h.b16 %v369
    %v901 = vunpack.c.l.b16 %v370
    %v902 = vunpack.c.h.b16 %v370
    %v903 = vunpack.c.l.b16 %v371
    %v904 = vunpack.c.l.b16 %v372
    %v905 = vunpack.c.h.b16 %v372
    %v906 = vunpack.c.l.b16 %v373
    %v907 = vunpack.c.h.b16 %v373
    %v908 = vunpack.c.l.b16 %v374
    %v909 = vunpack.c.h.b16 %v374
    %v910 = vunpack.c.l.b16 %v375
    %v911 = vunpack.c.h.b16 %v375
    %v912 = vunpack.c.l.b16 %v376
    %v913 = vunpack.c.h.b16 %v376
    %v914 = vunpack.c.l.b16 %v377
    %v915 = vunpack.c.l.b16 %v378
    %v916 = vunpack.c.h.b16 %v378
    %v917 = vunpack.c.l.b16 %v379
    %v918 = vunpack.c.h.b16 %v379
    %v919 = vunpack.c.l.b16 %v380
    %v920 = vunpack.c.h.b16 %v380
    %v921 = vunpack.c.l.b16 %v381
    %v922 = vunpack.c.h.b16 %v381
    %v923 = vunpack.c.l.b16 %v382
    %v924 = vunpack.c.h.b16 %v382
    %v925 = vunpack.c.l.b16 %v383
    %v926 = vunpack.c.l.b16 %v384
    %v927 = vunpack.c.h.b16 %v384
    %v928 = vunpack.c.l.b16 %v385
    %v929 = vunpack.c.h.b16 %v385
    %v930 = vunpack.c.l.b16 %v386
    %v931 = vunpack.c.h.b16 %v386
    %v932 = vunpack.c.l.b16 %v387
    %v933 = vunpack.c.h.b16 %v387
    %v934 = vunpack.c.l.b16 %v388
    %v935 = vunpack.c.h.b16 %v388
    %v936 = vunpack.c.l.b16 %v389
    %v937 = vunpack.c.l.b16 %v390
    %v938 = vunpack.c.h.b16 %v390
    %v939 = vunpack.c.l.b16 %v391
    %v940 = vunpack.c.h.b16 %v391
    %v941 = vunpack.c.l.b16 %v392
    %v942 = vunpack.c.h.b16 %v392
    %v943 = vunpack.c.l.b16 %v393
    %v944 = vunpack.c.h.b16 %v393
    %v945 = vunpack.c.l.b16 %v394
    %v946 = vunpack.c.h.b16 %v394
    %v947 = vunpack.c.l.b16 %v395
    %v948 = vunpack.c.l.b16 %v396
    %v949 = vunpack.c.h.b16 %v396
    %v950 = vunpack.c.l.b16 %v397
    %v951 = vunpack.c.h.b16 %v397
    %v952 = vunpack.c.l.b16 %v398
    %v953 = vunpack.c.h.b16 %v398
    %v954 = vunpack.c.l.b16 %v399
    %v955 = vunpack.c.h.b16 %v399
    %v956 = vunpack.c.l.b16 %v400
    %v957 = vunpack.c.h.b16 %v400
    %v958 = vunpack.c.l.b16 %v401
    %v959 = vunpack.c.l.b16 %v402
    %v960 = vunpack.c.h.b16 %v402
    %v961 = vunpack.c.l.b16 %v403
    %v962 = vunpack.c.h.b16 %v403
    %v963 = vunpack.c.l.b16 %v404
    %v964 = vunpack.c.h.b16 %v404
    %v965 = vunpack.c.l.b16 %v405
    %v966 = vunpack.c.h.b16 %v405
    %v967 = vunpack.c.l.b16 %v406
    %v968 = vunpack.c.h.b16 %v406
    %v969 = vunpack.c.l.b16 %v407
    %v970 = vunpack.c.l.b16 %v408
    %v971 = vunpack.c.h.b16 %v408
    %v972 = vunpack.c.l.b16 %v409
    %v973 = vunpack.c.h.b16 %v409
    %v974 = vunpack.c.l.b16 %v410
    %v975 = vunpack.c.h.b16 %v410
    %v976 = vunpack.c.l.b16 %v411
    %v977 = vunpack.c.h.b16 %v411
    %v978 = vunpack.c.l.b16 %v412
    %v979 = vunpack.c.h.b16 %v412
    %v980 = vunpack.c.l.b16 %v413
    %v981 = vunpack.c.l.b16 %v414
    %v982 = vunpack.c.h.b16 %v414
    %v983 = vunpack.c.l.b16 %v415
    %v984 = vunpack.c.h.b16 %v415
    %v985 = vunpack.c.l.b16 %v416
    %v986 = vunpack.c.h.b16 %v416
    %v987 = vunpack.c.l.b16 %v417
    %v988 = vunpack.c.h.b16 %v417
    %v989 = vunpack.c.l.b16 %v418
    %v990 = vunpack.c.h.b16 %v418
    %v991 = vunpack.c.l.b16 %v419
    %v992 = vunpack.c.l.b16 %v420
    %v993 = vunpack.c.h.b16 %v420
    %v994 = vunpack.c.l.b16 %v421
    %v995 = vunpack.c.h.b16 %v421
    %v996 = vunpack.c.l.b16 %v422
    %v997 = vunpack.c.h.b16 %v422
    %v998 = vunpack.c.l.b16 %v423
    %v999 = vunpack.c.h.b16 %v423
    %v1000 = vunpack.c.l.b16 %v424
    %v1001 = vunpack.c.h.b16 %v424
    %v1002 = vunpack.c.l.b16 %v425
    %v1003 = vunpack.c.l.b16 %v426
    %v1004 = vunpack.c.h.b16 %v426
    %v1005 = vunpack.c.l.b16 %v427
    %v1006 = vunpack.c.h.b16 %v427
    %v1007 = vunpack.c.l.b16 %v428
    %v1008 = vunpack.c.h.b16 %v428
    %v1009 = vunpack.c.l.b16 %v429
    %v1010 = vunpack.c.h.b16 %v429
    %v1011 = vunpack.c.l.b16 %v430
    %v1012 = vunpack.c.h.b16 %v430
    %v1013 = vunpack.c.l.b16 %v431
    %v1014 = vunpack.c.l.b16 %v432
    %v1015 = vunpack.c.h.b16 %v432
    %v1016 = vunpack.c.l.b16 %v433
    %v1017 = vunpack.c.h.b16 %v433
    %v1018 = vunpack.c.l.b16 %v434
    %v1019 = vunpack.c.h.b16 %v434
    %v1020 = vunpack.c.l.b16 %v435
    %v1021 = vunpack.c.h.b16 %v435
    %v1022 = vunpack.c.l.b16 %v436
    %v1023 = vunpack.c.h.b16 %v436
    %v1024 = vunpack.c.l.b16 %v437
    %v1025 = vunpack.c.l.b16 %v438
    %v1026 = vunpack.c.h.b16 %v438
    %v1027 = vunpack.c.l.b16 %v439
    %v1028 = vunpack.c.h.b16 %v439
    %v1029 = vunpack.c.l.b16 %v440
    %v1030 = vunpack.c.h.b16 %v440
    %v1031 = vunpack.c.l.b16 %v441
    %v1032 = vunpack.c.h.b16 %v441
    %v1033 = vunpack.c.l.b16 %v442
    %v1034 = vunpack.c.h.b16 %v442
    %v1035 = vunpack.c.l.b16 %v443
    %v1036 = vunpack.c.l.b16 %v444
    %v1037 = vunpack.c.h.b16 %v444
    %v1038 = vunpack.c.l.b16 %v445
    %v1039 = vunpack.c.h.b16 %v445
    %v1040 = vunpack.c.l.b16 %v446
    %v1041 = vunpack.c.h.b16 %v446
    %v1042 = vunpack.c.l.b16 %v447
    %v1043 = vunpack.c.h.b16 %v447
    %v1044 = vunpack.c.l.b16 %v448
    %v1045 = vunpack.c.h.b16 %v448
    %v1046 = vunpack.c.l.b16 %v449
    %v1047 = vunpack.c.l.b16 %v450
    %v1048 = vunpack.c.h.b16 %v450
    %v1049 = vunpack.c.l.b16 %v451
    %v1050 = vunpack.c.h.b16 %v451
    %v1051 = vunpack.c.l.b16 %v452
    %v1052 = vunpack.c.h.b16 %v452
    %v1053 = vunpack.c.l.b16 %v453
    %v1054 = vunpack.c.h.b16 %v453
    %v1055 = vunpack.c.l.b16 %v454
    %v1056 = vunpack.c.h.b16 %v454
    %v1057 = vunpack.c.l.b16 %v455
    %v1058 = vunpack.c.l.b16 %v456
    %v1059 = vunpack.c.h.b16 %v456
    %v1060 = vunpack.c.l.b16 %v457
    %v1061 = vunpack.c.h.b16 %v457
    %v1062 = vunpack.c.l.b16 %v458
    %v1063 = vunpack.c.h.b16 %v458
    %v1064 = vunpack.c.l.b16 %v459
    %v1065 = vunpack.c.h.b16 %v459
    %v1066 = vunpack.c.l.b16 %v460
    %v1067 = vunpack.c.h.b16 %v460
    %v1068 = vunpack.c.l.b16 %v461
    %v1069 = vunpack.c.l.b16 %v462
    %v1070 = vunpack.c.h.b16 %v462
    %v1071 = vunpack.c.l.b16 %v463
    %v1072 = vunpack.c.h.b16 %v463
    %v1073 = vunpack.c.l.b16 %v464
    %v1074 = vunpack.c.h.b16 %v464
    %v1075 = vunpack.c.l.b16 %v465
    %v1076 = vunpack.c.h.b16 %v465
    %v1077 = vunpack.c.l.b16 %v466
    %v1078 = vunpack.c.h.b16 %v466
    %v1079 = vunpack.c.l.b16 %v467
    %v1080 = vpack.c.b16 %v695, %v684
    %v1081 = vpack.c.b16 %v696, %v685
    %v1082 = vpack.c.b16 %v697, %v686
    %v1083 = vpack.c.b16 %v698, %v687
    %v1084 = vpack.c.b16 %v699, %v688
    %v1085 = vpack.c.b16 %v700, %v689
    %v1086 = vpack.c.b16 %v701, %v690
    %v1087 = vpack.c.b16 %v702, %v691
    %v1088 = vpack.c.b16 %v703, %v692
    %v1089 = vpack.c.b16 %v704, %v693
    %v1090 = vpack.c.b16 %v705, %v694
    %v1091 = vpack.c.b16 %v717, %v706
    %v1092 = vpack.c.b16 %v718, %v707
    %v1093 = vpack.c.b16 %v719, %v708
    %v1094 = vpack.c.b16 %v720, %v709
    %v1095 = vpack.c.b16 %v721, %v710
    %v1096 = vpack.c.b16 %v722, %v711
    %v1097 = vpack.c.b16 %v723, %v712
    %v1098 = vpack.c.b16 %v724, %v713
    %v1099 = vpack.c.b16 %v725, %v714
    %v1100 = vpack.c.b16 %v726, %v715
    %v1101 = vpack.c.b16 %v727, %v716
    %v1102 = vpack.c.b16 %v739, %v728
    %v1103 = vpack.c.b16 %v740, %v729
    %v1104 = vpack.c.b16 %v741, %v730
    %v1105 = vpack.c.b16 %v742, %v731
    %v1106 = vpack.c.b16 %v743, %v732
    %v1107 = vpack.c.b16 %v744, %v733
    %v1108 = vpack.c.b16 %v745, %v734
    %v1109 = vpack.c.b16 %v746, %v735
    %v1110 = vpack.c.b16 %v747, %v736
    %v1111 = vpack.c.b16 %v748, %v737
    %v1112 = vpack.c.b16 %v749, %v738
    %v1113 = vpack.c.b16 %v761, %v750
    %v1114 = vpack.c.b16 %v762, %v751
    %v1115 = vpack.c.b16 %v763, %v752
    %v1116 = vpack.c.b16 %v764, %v753
    %v1117 = vpack.c.b16 %v765, %v754
    %v1118 = vpack.c.b16 %v766, %v755
    %v1119 = vpack.c.b16 %v767, %v756
    %v1120 = vpack.c.b16 %v768, %v757
    %v1121 = vpack.c.b16 %v769, %v758
    %v1122 = vpack.c.b16 %v770, %v759
    %v1123 = vpack.c.b16 %v771, %v760
    %v1124 = vpack.c.b16 %v783, %v772
    %v1125 = vpack.c.b16 %v784, %v773
    %v1126 = vpack.c.b16 %v785, %v774
    %v1127 = vpack.c.b16 %v786, %v775
    %v1128 = vpack.c.b16 %v787, %v776
    %v1129 = vpack.c.b16 %v788, %v777
    %v1130 = vpack.c.b16 %v789, %v778
    %v1131 = vpack.c.b16 %v790, %v779
    %v1132 = vpack.c.b16 %v791, %v780
    %v1133 = vpack.c.b16 %v792, %v781
    %v1134 = vpack.c.b16 %v793, %v782
    %v1135 = vpack.c.b16 %v805, %v794
    %v1136 = vpack.c.b16 %v806, %v795
    %v1137 = vpack.c.b16 %v807, %v796
    %v1138 = vpack.c.b16 %v808, %v797
    %v1139 = vpack.c.b16 %v809, %v798
    %v1140 = vpack.c.b16 %v810, %v799
    %v1141 = vpack.c.b16 %v811, %v800
    %v1142 = vpack.c.b16 %v812, %v801
    %v1143 = vpack.c.b16 %v813, %v802
    %v1144 = vpack.c.b16 %v814, %v803
    %v1145 = vpack.c.b16 %v815, %v804
    %v1146 = vpack.c.b16 %v827, %v816
    %v1147 = vpack.c.b16 %v828, %v817
    %v1148 = vpack.c.b16 %v829, %v818
    %v1149 = vpack.c.b16 %v830, %v819
    %v1150 = vpack.c.b16 %v831, %v820
    %v1151 = vpack.c.b16 %v832, %v821
    %v1152 = vpack.c.b16 %v833, %v822
    %v1153 = vpack.c.b16 %v834, %v823
    %v1154 = vpack.c.b16 %v835, %v824
    %v1155 = vpack.c.b16 %v836, %v825
    %v1156 = vpack.c.b16 %v837, %v826
    %v1157 = vpack.c.b16 %v849, %v838
    %v1158 = vpack.c.b16 %v850, %v839
    %v1159 = vpack.c.b16 %v851, %v840
    %v1160 = vpack.c.b16 %v852, %v841
    %v1161 = vpack.c.b16 %v853, %v842
    %v1162 = vpack.c.b16 %v854, %v843
    %v1163 = vpack.c.b16 %v855, %v844
    %v1164 = vpack.c.b16 %v856, %v845
    %v1165 = vpack.c.b16 %v857, %v846
    %v1166 = vpack.c.b16 %v858, %v847
    %v1167 = vpack.c.b16 %v859, %v848
    %v1168 = vpack.c.b16 %v871, %v860
    %v1169 = vpack.c.b16 %v872, %v861
    %v1170 = vpack.c.b16 %v873, %v862
    %v1171 = vpack.c.b16 %v874, %v863
    %v1172 = vpack.c.b16 %v875, %v864
    %v1173 = vpack.c.b16 %v876, %v865
    %v1174 = vpack.c.b16 %v877, %v866
    %v1175 = vpack.c.b16 %v878, %v867
    %v1176 = vpack.c.b16 %v879, %v868
    %v1177 = vpack.c.b16 %v880, %v869
    %v1178 = vpack.c.b16 %v881, %v870
    %v1179 = vpack.c.b16 %v893, %v882
    %v1180 = vpack.c.b16 %v894, %v883
    %v1181 = vpack.c.b16 %v895, %v884
    %v1182 = vpack.c.b16 %v896, %v885
    %v1183 = vpack.c.b16 %v897, %v886
    %v1184 = vpack.c.b16 %v898, %v887
    %v1185 = vpack.c.b16 %v899, %v888
    %v1186 = vpack.c.b16 %v900, %v889
    %v1187 = vpack.c.b16 %v901, %v890
    %v1188 = vpack.c.b16 %v902, %v891
    %v1189 = vpack.c.b16 %v903, %v892
    %v1190 = vpack.c.b16 %v915, %v904
    %v1191 = vpack.c.b16 %v916, %v905
    %v1192 = vpack.c.b16 %v917, %v906
    %v1193 = vpack.c.b16 %v918, %v907
    %v1194 = vpack.c.b16 %v919, %v908
    %v1195 = vpack.c.b16 %v920, %v909
    %v1196 = vpack.c.b16 %v921, %v910
    %v1197 = vpack.c.b16 %v922, %v911
    %v1198 = vpack.c.b16 %v923, %v912
    %v1199 = vpack.c.b16 %v924, %v913
    %v1200 = vpack.c.b16 %v925, %v914
    %v1201 = vpack.c.b16 %v937, %v926
    %v1202 = vpack.c.b16 %v938, %v927
    %v1203 = vpack.c.b16 %v939, %v928
    %v1204 = vpack.c.b16 %v940, %v929
    %v1205 = vpack.c.b16 %v941, %v930
    %v1206 = vpack.c.b16 %v942, %v931
    %v1207 = vpack.c.b16 %v943, %v932
    %v1208 = vpack.c.b16 %v944, %v933
    %v1209 = vpack.c.b16 %v945, %v934
    %v1210 = vpack.c.b16 %v946, %v935
    %v1211 = vpack.c.b16 %v947, %v936
    %v1212 = vpack.c.b16 %v959, %v948
    %v1213 = vpack.c.b16 %v960, %v949
    %v1214 = vpack.c.b16 %v961, %v950
    %v1215 = vpack.c.b16 %v962, %v951
    %v1216 = vpack.c.b16 %v963, %v952
    %v1217 = vpack.c.b16 %v964, %v953
    %v1218 = vpack.c.b16 %v965, %v954
    %v1219 = vpack.c.b16 %v966, %v955
    %v1220 = vpack.c.b16 %v967, %v956
    %v1221 = vpack.c.b16 %v968, %v957
    %v1222 = vpack.c.b16 %v969, %v958
    %v1223 = vpack.c.b16 %v981, %v970
    %v1224 = vpack.c.b16 %v982, %v971
    %v1225 = vpack.c.b16 %v983, %v972
    %v1226 = vpack.c.b16 %v984, %v973
    %v1227 = vpack.c.b16 %v985, %v974
    %v1228 = vpack.c.b16 %v986, %v975
    %v1229 = vpack.c.b16 %v987, %v976
    %v1230 = vpack.c.b16 %v988, %v977
    %v1231 = vpack.c.b16 %v989, %v978
    %v1232 = vpack.c.b16 %v990, %v979
    %v1233 = vpack.c.b16 %v991, %v980
    %v1234 = vpack.c.b16 %v1003, %v992
    %v1235 = vpack.c.b16 %v1004, %v993
    %v1236 = vpack.c.b16 %v1005, %v994
    %v1237 = vpack.c.b16 %v1006, %v995
    %v1238 = vpack.c.b16 %v1007, %v996
    %v1239 = vpack.c.b16 %v1008, %v997
    %v1240 = vpack.c.b16 %v1009, %v998
    %v1241 = vpack.c.b16 %v1010, %v999
    %v1242 = vpack.c.b16 %v1011, %v1000
    %v1243 = vpack.c.b16 %v1012, %v1001
    %v1244 = vpack.c.b16 %v1013, %v1002
    %v1245 = vpack.c.b16 %v1025, %v1014
    %v1246 = vpack.c.b16 %v1026, %v1015
    %v1247 = vpack.c.b16 %v1027, %v1016
    %v1248 = vpack.c.b16 %v1028, %v1017
    %v1249 = vpack.c.b16 %v1029, %v1018
    %v1250 = vpack.c.b16 %v1030, %v1019
    %v1251 = vpack.c.b16 %v1031, %v1020
    %v1252 = vpack.c.b16 %v1032, %v1021
    %v1253 = vpack.c.b16 %v1033, %v1022
    %v1254 = vpack.c.b16 %v1034, %v1023
    %v1255 = vpack.c.b16 %v1035, %v1024
    %v1256 = vpack.c.b16 %v1047, %v1036
    %v1257 = vpack.c.b16 %v1048, %v1037
    %v1258 = vpack.c.b16 %v1049, %v1038
    %v1259 = vpack.c.b16 %v1050, %v1039
    %v1260 = vpack.c.b16 %v1051, %v1040
    %v1261 = vpack.c.b16 %v1052, %v1041
    %v1262 = vpack.c.b16 %v1053, %v1042
    %v1263 = vpack.c.b16 %v1054, %v1043
    %v1264 = vpack.c.b16 %v1055, %v1044
    %v1265 = vpack.c.b16 %v1056, %v1045
    %v1266 = vpack.c.b16 %v1057, %v1046
    %v1267 = vpack.c.b16 %v1069, %v1058
    %v1268 = vpack.c.b16 %v1070, %v1059
    %v1269 = vpack.c.b16 %v1071, %v1060
    %v1270 = vpack.c.b16 %v1072, %v1061
    %v1271 = vpack.c.b16 %v1073, %v1062
    %v1272 = vpack.c.b16 %v1074, %v1063
    %v1273 = vpack.c.b16 %v1075, %v1064
    %v1274 = vpack.c.b16 %v1076, %v1065
    %v1275 = vpack.c.b16 %v1077, %v1066
    %v1276 = vpack.c.b16 %v1078, %v1067
    %v1277 = vpack.c.b16 %v1079, %v1068
    %vm1476 = vcmask 261120
    %v1478 = vsel %vm1476, %v251, 0
    %1480 = vmatpush.bf16.msra.mxu0 %v1157
    %1481 = vmatpush.bf16.msra.mxu0 %v1146
    %1482 = vmatpush.bf16.msra.mxu0 %v1135
    %1483 = vmatpush.bf16.msra.mxu0 %v1124
    %1484 = vmatpush.bf16.msra.mxu0 %v1113
    %1485 = vmatpush.bf16.msra.mxu0 %v1102
    %1486 = vmatpush.bf16.msra.mxu0 %v1091
    %1487 = vmatpush.bf16.msra.mxu0 %v1080
    %1488 = vmatmul.bf16.gmra.mxu0 %v249
    %v1489 = vpop.f32.mrf.mxu0
    %v1490 = vadd.f32 0.0, %v1489
    %v1491 = vpop.f32.mrf.mxu0
    %v1492 = vadd.f32 0.0, %v1491
    %1493 = vdwg.mxu0
    %1494 = vmatpush.bf16.msra.mxu0 %v1245
    %1495 = vmatpush.bf16.msra.mxu0 %v1234
    %1496 = vmatpush.bf16.msra.mxu0 %v1223
    %1497 = vmatpush.bf16.msra.mxu0 %v1212
    %1498 = vmatpush.bf16.msra.mxu0 %v1201
    %1499 = vmatpush.bf16.msra.mxu0 %v1190
    %1500 = vmatpush.bf16.msra.mxu0 %v1179
    %1501 = vmatpush.bf16.msra.mxu0 %v1168
    %1502 = vmatmul.bf16.gmra.mxu0 %v250
    %v1503 = vpop.f32.mrf.mxu0
    %v1504 = vadd.f32 %v1490, %v1503
    %v1505 = vpop.f32.mrf.mxu0
    %v1506 = vadd.f32 %v1492, %v1505
    %1507 = vdwg.mxu0
    %1508 = vmatpush.bf16.msra.mxu0 0
    %1509 = vmatpush.bf16.msra.mxu0 0
    %1510 = vmatpush.bf16.msra.mxu0 0
    %1511 = vmatpush.bf16.msra.mxu0 0
    %1512 = vmatpush.bf16.msra.mxu0 0
    %1513 = vmatpush.bf16.msra.mxu0 0
    %1514 = vmatpush.bf16.msra.mxu0 %v1267
    %1515 = vmatpush.bf16.msra.mxu0 %v1256
    %1516 = vmatmul.bf16.gmra.mxu0 %v1478
    %v1517 = vpop.f32.mrf.mxu0
    %v1518 = vadd.f32 %v1504, %v1517
    %v1519 = vpop.f32.mrf.mxu0
    %v1520 = vadd.f32 %v1506, %v1519
    %1521 = vdwg.mxu0
    %1522 = vmatpush.bf16.msra.mxu0 %v1158
    %1523 = vmatpush.bf16.msra.mxu0 %v1147
    %1524 = vmatpush.bf16.msra.mxu0 %v1136
    %1525 = vmatpush.bf16.msra.mxu0 %v1125
    %1526 = vmatpush.bf16.msra.mxu0 %v1114
    %1527 = vmatpush.bf16.msra.mxu0 %v1103
    %1528 = vmatpush.bf16.msra.mxu0 %v1092
    %1529 = vmatpush.bf16.msra.mxu0 %v1081
    %1530 = vmatmul.bf16.gmra.mxu0 %v249
    %v1531 = vpop.f32.mrf.mxu0
    %v1532 = vadd.f32 0.0, %v1531
    %v1533 = vpop.f32.mrf.mxu0
    %v1534 = vadd.f32 0.0, %v1533
    %1535 = vdwg.mxu0
    %1536 = vmatpush.bf16.msra.mxu0 %v1246
    %1537 = vmatpush.bf16.msra.mxu0 %v1235
    %1538 = vmatpush.bf16.msra.mxu0 %v1224
    %1539 = vmatpush.bf16.msra.mxu0 %v1213
    %1540 = vmatpush.bf16.msra.mxu0 %v1202
    %1541 = vmatpush.bf16.msra.mxu0 %v1191
    %1542 = vmatpush.bf16.msra.mxu0 %v1180
    %1543 = vmatpush.bf16.msra.mxu0 %v1169
    %1544 = vmatmul.bf16.gmra.mxu0 %v250
    %v1545 = vpop.f32.mrf.mxu0
    %v1546 = vadd.f32 %v1532, %v1545
    %v1547 = vpop.f32.mrf.mxu0
    %v1548 = vadd.f32 %v1534, %v1547
    %1549 = vdwg.mxu0
    %1550 = vmatpush.bf16.msra.mxu0 0
    %1551 = vmatpush.bf16.msra.mxu0 0
    %1552 = vmatpush.bf16.msra.mxu0 0
    %1553 = vmatpush.bf16.msra.mxu0 0
    %1554 = vmatpush.bf16.msra.mxu0 0
    %1555 = vmatpush.bf16.msra.mxu0 0
    %1556 = vmatpush.bf16.msra.mxu0 %v1268
    %1557 = vmatpush.bf16.msra.mxu0 %v1257
    %1558 = vmatmul.bf16.gmra.mxu0 %v1478
    %v1559 = vpop.f32.mrf.mxu0
    %v1560 = vadd.f32 %v1546, %v1559
    %v1561 = vpop.f32.mrf.mxu0
    %v1562 = vadd.f32 %v1548, %v1561
    %1563 = vdwg.mxu0
    %1564 = vmatpush.bf16.msra.mxu0 %v1159
    %1565 = vmatpush.bf16.msra.mxu0 %v1148
    %1566 = vmatpush.bf16.msra.mxu0 %v1137
    %1567 = vmatpush.bf16.msra.mxu0 %v1126
    %1568 = vmatpush.bf16.msra.mxu0 %v1115
    %1569 = vmatpush.bf16.msra.mxu0 %v1104
    %1570 = vmatpush.bf16.msra.mxu0 %v1093
    %1571 = vmatpush.bf16.msra.mxu0 %v1082
    %1572 = vmatmul.bf16.gmra.mxu0 %v249
    %v1573 = vpop.f32.mrf.mxu0
    %v1574 = vadd.f32 0.0, %v1573
    %v1575 = vpop.f32.mrf.mxu0
    %v1576 = vadd.f32 0.0, %v1575
    %1577 = vdwg.mxu0
    %1578 = vmatpush.bf16.msra.mxu0 %v1247
    %1579 = vmatpush.bf16.msra.mxu0 %v1236
    %1580 = vmatpush.bf16.msra.mxu0 %v1225
    %1581 = vmatpush.bf16.msra.mxu0 %v1214
    %1582 = vmatpush.bf16.msra.mxu0 %v1203
    %1583 = vmatpush.bf16.msra.mxu0 %v1192
    %1584 = vmatpush.bf16.msra.mxu0 %v1181
    %1585 = vmatpush.bf16.msra.mxu0 %v1170
    %1586 = vmatmul.bf16.gmra.mxu0 %v250
    %v1587 = vpop.f32.mrf.mxu0
    %v1588 = vadd.f32 %v1574, %v1587
    %v1589 = vpop.f32.mrf.mxu0
    %v1590 = vadd.f32 %v1576, %v1589
    %1591 = vdwg.mxu0
    %1592 = vmatpush.bf16.msra.mxu0 0
    %1593 = vmatpush.bf16.msra.mxu0 0
    %1594 = vmatpush.bf16.msra.mxu0 0
    %1595 = vmatpush.bf16.msra.mxu0 0
    %1596 = vmatpush.bf16.msra.mxu0 0
    %1597 = vmatpush.bf16.msra.mxu0 0
    %1598 = vmatpush.bf16.msra.mxu0 %v1269
    %1599 = vmatpush.bf16.msra.mxu0 %v1258
    %1600 = vmatmul.bf16.gmra.mxu0 %v1478
    %v1601 = vpop.f32.mrf.mxu0
    %v1602 = vadd.f32 %v1588, %v1601
    %v1603 = vpop.f32.mrf.mxu0
    %v1604 = vadd.f32 %v1590, %v1603
    %1605 = vdwg.mxu0
    %1606 = vmatpush.bf16.msra.mxu0 %v1160
    %1607 = vmatpush.bf16.msra.mxu0 %v1149
    %1608 = vmatpush.bf16.msra.mxu0 %v1138
    %1609 = vmatpush.bf16.msra.mxu0 %v1127
    %1610 = vmatpush.bf16.msra.mxu0 %v1116
    %1611 = vmatpush.bf16.msra.mxu0 %v1105
    %1612 = vmatpush.bf16.msra.mxu0 %v1094
    %1613 = vmatpush.bf16.msra.mxu0 %v1083
    %1614 = vmatmul.bf16.gmra.mxu0 %v249
    %v1615 = vpop.f32.mrf.mxu0
    %v1616 = vadd.f32 0.0, %v1615
    %v1617 = vpop.f32.mrf.mxu0
    %v1618 = vadd.f32 0.0, %v1617
    %1619 = vdwg.mxu0
    %1620 = vmatpush.bf16.msra.mxu0 %v1248
    %1621 = vmatpush.bf16.msra.mxu0 %v1237
    %1622 = vmatpush.bf16.msra.mxu0 %v1226
    %1623 = vmatpush.bf16.msra.mxu0 %v1215
    %1624 = vmatpush.bf16.msra.mxu0 %v1204
    %1625 = vmatpush.bf16.msra.mxu0 %v1193
    %1626 = vmatpush.bf16.msra.mxu0 %v1182
    %1627 = vmatpush.bf16.msra.mxu0 %v1171
    %1628 = vmatmul.bf16.gmra.mxu0 %v250
    %v1629 = vpop.f32.mrf.mxu0
    %v1630 = vadd.f32 %v1616, %v1629
    %v1631 = vpop.f32.mrf.mxu0
    %v1632 = vadd.f32 %v1618, %v1631
    %1633 = vdwg.mxu0
    %1634 = vmatpush.bf16.msra.mxu0 0
    %1635 = vmatpush.bf16.msra.mxu0 0
    %1636 = vmatpush.bf16.msra.mxu0 0
    %1637 = vmatpush.bf16.msra.mxu0 0
    %1638 = vmatpush.bf16.msra.mxu0 0
    %1639 = vmatpush.bf16.msra.mxu0 0
    %1640 = vmatpush.bf16.msra.mxu0 %v1270
    %1641 = vmatpush.bf16.msra.mxu0 %v1259
    %1642 = vmatmul.bf16.gmra.mxu0 %v1478
    %v1643 = vpop.f32.mrf.mxu0
    %v1644 = vadd.f32 %v1630, %v1643
    %v1645 = vpop.f32.mrf.mxu0
    %v1646 = vadd.f32 %v1632, %v1645
    %1647 = vdwg.mxu0
    %1648 = vmatpush.bf16.msra.mxu0 %v1161
    %1649 = vmatpush.bf16.msra.mxu0 %v1150
    %1650 = vmatpush.bf16.msra.mxu0 %v1139
    %1651 = vmatpush.bf16.msra.mxu0 %v1128
    %1652 = vmatpush.bf16.msra.mxu0 %v1117
    %1653 = vmatpush.bf16.msra.mxu0 %v1106
    %1654 = vmatpush.bf16.msra.mxu0 %v1095
    %1655 = vmatpush.bf16.msra.mxu0 %v1084
    %1656 = vmatmul.bf16.gmra.mxu0 %v249
    %v1657 = vpop.f32.mrf.mxu0
    %v1658 = vadd.f32 0.0, %v1657
    %v1659 = vpop.f32.mrf.mxu0
    %v1660 = vadd.f32 0.0, %v1659
    %1661 = vdwg.mxu0
    %1662 = vmatpush.bf16.msra.mxu0 %v1249
    %1663 = vmatpush.bf16.msra.mxu0 %v1238
    %1664 = vmatpush.bf16.msra.mxu0 %v1227
    %1665 = vmatpush.bf16.msra.mxu0 %v1216
    %1666 = vmatpush.bf16.msra.mxu0 %v1205
    %1667 = vmatpush.bf16.msra.mxu0 %v1194
    %1668 = vmatpush.bf16.msra.mxu0 %v1183
    %1669 = vmatpush.bf16.msra.mxu0 %v1172
    %1670 = vmatmul.bf16.gmra.mxu0 %v250
    %v1671 = vpop.f32.mrf.mxu0
    %v1672 = vadd.f32 %v1658, %v1671
    %v1673 = vpop.f32.mrf.mxu0
    %v1674 = vadd.f32 %v1660, %v1673
    %1675 = vdwg.mxu0
    %1676 = vmatpush.bf16.msra.mxu0 0
    %1677 = vmatpush.bf16.msra.mxu0 0
    %1678 = vmatpush.bf16.msra.mxu0 0
    %1679 = vmatpush.bf16.msra.mxu0 0
    %1680 = vmatpush.bf16.msra.mxu0 0
    %1681 = vmatpush.bf16.msra.mxu0 0
    %1682 = vmatpush.bf16.msra.mxu0 %v1271
    %1683 = vmatpush.bf16.msra.mxu0 %v1260
    %1684 = vmatmul.bf16.gmra.mxu0 %v1478
    %v1685 = vpop.f32.mrf.mxu0
    %v1686 = vadd.f32 %v1672, %v1685
    %v1687 = vpop.f32.mrf.mxu0
    %v1688 = vadd.f32 %v1674, %v1687
    %1689 = vdwg.mxu0
    %1690 = vmatpush.bf16.msra.mxu0 %v1162
    %1691 = vmatpush.bf16.msra.mxu0 %v1151
    %1692 = vmatpush.bf16.msra.mxu0 %v1140
    %1693 = vmatpush.bf16.msra.mxu0 %v1129
    %1694 = vmatpush.bf16.msra.mxu0 %v1118
    %1695 = vmatpush.bf16.msra.mxu0 %v1107
    %1696 = vmatpush.bf16.msra.mxu0 %v1096
    %1697 = vmatpush.bf16.msra.mxu0 %v1085
    %1698 = vmatmul.bf16.gmra.mxu0 %v249
    %v1699 = vpop.f32.mrf.mxu0
    %v1700 = vadd.f32 0.0, %v1699
    %v1701 = vpop.f32.mrf.mxu0
    %v1702 = vadd.f32 0.0, %v1701
    %1703 = vdwg.mxu0
    %1704 = vmatpush.bf16.msra.mxu0 %v1250
    %1705 = vmatpush.bf16.msra.mxu0 %v1239
    %1706 = vmatpush.bf16.msra.mxu0 %v1228
    %1707 = vmatpush.bf16.msra.mxu0 %v1217
    %1708 = vmatpush.bf16.msra.mxu0 %v1206
    %1709 = vmatpush.bf16.msra.mxu0 %v1195
    %1710 = vmatpush.bf16.msra.mxu0 %v1184
    %1711 = vmatpush.bf16.msra.mxu0 %v1173
    %1712 = vmatmul.bf16.gmra.mxu0 %v250
    %v1713 = vpop.f32.mrf.mxu0
    %v1714 = vadd.f32 %v1700, %v1713
    %v1715 = vpop.f32.mrf.mxu0
    %v1716 = vadd.f32 %v1702, %v1715
    %1717 = vdwg.mxu0
    %1718 = vmatpush.bf16.msra.mxu0 0
    %1719 = vmatpush.bf16.msra.mxu0 0
    %1720 = vmatpush.bf16.msra.mxu0 0
    %1721 = vmatpush.bf16.msra.mxu0 0
    %1722 = vmatpush.bf16.msra.mxu0 0
    %1723 = vmatpush.bf16.msra.mxu0 0
    %1724 = vmatpush.bf16.msra.mxu0 %v1272
    %1725 = vmatpush.bf16.msra.mxu0 %v1261
    %1726 = vmatmul.bf16.gmra.mxu0 %v1478
    %v1727 = vpop.f32.mrf.mxu0
    %v1728 = vadd.f32 %v1714, %v1727
    %v1729 = vpop.f32.mrf.mxu0
    %v1730 = vadd.f32 %v1716, %v1729
    %1731 = vdwg.mxu0
    %1732 = vmatpush.bf16.msra.mxu0 %v1163
    %1733 = vmatpush.bf16.msra.mxu0 %v1152
    %1734 = vmatpush.bf16.msra.mxu0 %v1141
    %1735 = vmatpush.bf16.msra.mxu0 %v1130
    %1736 = vmatpush.bf16.msra.mxu0 %v1119
    %1737 = vmatpush.bf16.msra.mxu0 %v1108
    %1738 = vmatpush.bf16.msra.mxu0 %v1097
    %1739 = vmatpush.bf16.msra.mxu0 %v1086
    %1740 = vmatmul.bf16.gmra.mxu0 %v249
    %v1741 = vpop.f32.mrf.mxu0
    %v1742 = vadd.f32 0.0, %v1741
    %v1743 = vpop.f32.mrf.mxu0
    %v1744 = vadd.f32 0.0, %v1743
    %1745 = vdwg.mxu0
    %1746 = vmatpush.bf16.msra.mxu0 %v1251
    %1747 = vmatpush.bf16.msra.mxu0 %v1240
    %1748 = vmatpush.bf16.msra.mxu0 %v1229
    %1749 = vmatpush.bf16.msra.mxu0 %v1218
    %1750 = vmatpush.bf16.msra.mxu0 %v1207
    %1751 = vmatpush.bf16.msra.mxu0 %v1196
    %1752 = vmatpush.bf16.msra.mxu0 %v1185
    %1753 = vmatpush.bf16.msra.mxu0 %v1174
    %1754 = vmatmul.bf16.gmra.mxu0 %v250
    %v1755 = vpop.f32.mrf.mxu0
    %v1756 = vadd.f32 %v1742, %v1755
    %v1757 = vpop.f32.mrf.mxu0
    %v1758 = vadd.f32 %v1744, %v1757
    %1759 = vdwg.mxu0
    %1760 = vmatpush.bf16.msra.mxu0 0
    %1761 = vmatpush.bf16.msra.mxu0 0
    %1762 = vmatpush.bf16.msra.mxu0 0
    %1763 = vmatpush.bf16.msra.mxu0 0
    %1764 = vmatpush.bf16.msra.mxu0 0
    %1765 = vmatpush.bf16.msra.mxu0 0
    %1766 = vmatpush.bf16.msra.mxu0 %v1273
    %1767 = vmatpush.bf16.msra.mxu0 %v1262
    %1768 = vmatmul.bf16.gmra.mxu0 %v1478
    %v1769 = vpop.f32.mrf.mxu0
    %v1770 = vadd.f32 %v1756, %v1769
    %v1771 = vpop.f32.mrf.mxu0
    %v1772 = vadd.f32 %v1758, %v1771
    %1773 = vdwg.mxu0
    %1774 = vmatpush.bf16.msra.mxu0 %v1164
    %1775 = vmatpush.bf16.msra.mxu0 %v1153
    %1776 = vmatpush.bf16.msra.mxu0 %v1142
    %1777 = vmatpush.bf16.msra.mxu0 %v1131
    %1778 = vmatpush.bf16.msra.mxu0 %v1120
    %1779 = vmatpush.bf16.msra.mxu0 %v1109
    %1780 = vmatpush.bf16.msra.mxu0 %v1098
    %1781 = vmatpush.bf16.msra.mxu0 %v1087
    %1782 = vmatmul.bf16.gmra.mxu0 %v249
    %v1783 = vpop.f32.mrf.mxu0
    %v1784 = vadd.f32 0.0, %v1783
    %v1785 = vpop.f32.mrf.mxu0
    %v1786 = vadd.f32 0.0, %v1785
    %1787 = vdwg.mxu0
    %1788 = vmatpush.bf16.msra.mxu0 %v1252
    %1789 = vmatpush.bf16.msra.mxu0 %v1241
    %1790 = vmatpush.bf16.msra.mxu0 %v1230
    %1791 = vmatpush.bf16.msra.mxu0 %v1219
    %1792 = vmatpush.bf16.msra.mxu0 %v1208
    %1793 = vmatpush.bf16.msra.mxu0 %v1197
    %1794 = vmatpush.bf16.msra.mxu0 %v1186
    %1795 = vmatpush.bf16.msra.mxu0 %v1175
    %1796 = vmatmul.bf16.gmra.mxu0 %v250
    %v1797 = vpop.f32.mrf.mxu0
    %v1798 = vadd.f32 %v1784, %v1797
    %v1799 = vpop.f32.mrf.mxu0
    %v1800 = vadd.f32 %v1786, %v1799
    %1801 = vdwg.mxu0
    %1802 = vmatpush.bf16.msra.mxu0 0
    %1803 = vmatpush.bf16.msra.mxu0 0
    %1804 = vmatpush.bf16.msra.mxu0 0
    %1805 = vmatpush.bf16.msra.mxu0 0
    %1806 = vmatpush.bf16.msra.mxu0 0
    %1807 = vmatpush.bf16.msra.mxu0 0
    %1808 = vmatpush.bf16.msra.mxu0 %v1274
    %1809 = vmatpush.bf16.msra.mxu0 %v1263
    %1810 = vmatmul.bf16.gmra.mxu0 %v1478
    %v1811 = vpop.f32.mrf.mxu0
    %v1812 = vadd.f32 %v1798, %v1811
    %v1813 = vpop.f32.mrf.mxu0
    %v1814 = vadd.f32 %v1800, %v1813
    %1815 = vdwg.mxu0
    %1816 = vmatpush.bf16.msra.mxu0 %v1165
    %1817 = vmatpush.bf16.msra.mxu0 %v1154
    %1818 = vmatpush.bf16.msra.mxu0 %v1143
    %1819 = vmatpush.bf16.msra.mxu0 %v1132
    %1820 = vmatpush.bf16.msra.mxu0 %v1121
    %1821 = vmatpush.bf16.msra.mxu0 %v1110
    %1822 = vmatpush.bf16.msra.mxu0 %v1099
    %1823 = vmatpush.bf16.msra.mxu0 %v1088
    %1824 = vmatmul.bf16.gmra.mxu0 %v249
    %v1825 = vpop.f32.mrf.mxu0
    %v1826 = vadd.f32 0.0, %v1825
    %v1827 = vpop.f32.mrf.mxu0
    %v1828 = vadd.f32 0.0, %v1827
    %1829 = vdwg.mxu0
    %1830 = vmatpush.bf16.msra.mxu0 %v1253
    %1831 = vmatpush.bf16.msra.mxu0 %v1242
    %1832 = vmatpush.bf16.msra.mxu0 %v1231
    %1833 = vmatpush.bf16.msra.mxu0 %v1220
    %1834 = vmatpush.bf16.msra.mxu0 %v1209
    %1835 = vmatpush.bf16.msra.mxu0 %v1198
    %1836 = vmatpush.bf16.msra.mxu0 %v1187
    %1837 = vmatpush.bf16.msra.mxu0 %v1176
    %1838 = vmatmul.bf16.gmra.mxu0 %v250
    %v1839 = vpop.f32.mrf.mxu0
    %v1840 = vadd.f32 %v1826, %v1839
    %v1841 = vpop.f32.mrf.mxu0
    %v1842 = vadd.f32 %v1828, %v1841
    %1843 = vdwg.mxu0
    %1844 = vmatpush.bf16.msra.mxu0 0
    %1845 = vmatpush.bf16.msra.mxu0 0
    %1846 = vmatpush.bf16.msra.mxu0 0
    %1847 = vmatpush.bf16.msra.mxu0 0
    %1848 = vmatpush.bf16.msra.mxu0 0
    %1849 = vmatpush.bf16.msra.mxu0 0
    %1850 = vmatpush.bf16.msra.mxu0 %v1275
    %1851 = vmatpush.bf16.msra.mxu0 %v1264
    %1852 = vmatmul.bf16.gmra.mxu0 %v1478
    %v1853 = vpop.f32.mrf.mxu0
    %v1854 = vadd.f32 %v1840, %v1853
    %v1855 = vpop.f32.mrf.mxu0
    %v1856 = vadd.f32 %v1842, %v1855
    %1857 = vdwg.mxu0
    %1858 = vmatpush.bf16.msra.mxu0 %v1166
    %1859 = vmatpush.bf16.msra.mxu0 %v1155
    %1860 = vmatpush.bf16.msra.mxu0 %v1144
    %1861 = vmatpush.bf16.msra.mxu0 %v1133
    %1862 = vmatpush.bf16.msra.mxu0 %v1122
    %1863 = vmatpush.bf16.msra.mxu0 %v1111
    %1864 = vmatpush.bf16.msra.mxu0 %v1100
    %1865 = vmatpush.bf16.msra.mxu0 %v1089
    %1866 = vmatmul.bf16.gmra.mxu0 %v249
    %v1867 = vpop.f32.mrf.mxu0
    %v1868 = vadd.f32 0.0, %v1867
    %v1869 = vpop.f32.mrf.mxu0
    %v1870 = vadd.f32 0.0, %v1869
    %1871 = vdwg.mxu0
    %1872 = vmatpush.bf16.msra.mxu0 %v1254
    %1873 = vmatpush.bf16.msra.mxu0 %v1243
    %1874 = vmatpush.bf16.msra.mxu0 %v1232
    %1875 = vmatpush.bf16.msra.mxu0 %v1221
    %1876 = vmatpush.bf16.msra.mxu0 %v1210
    %1877 = vmatpush.bf16.msra.mxu0 %v1199
    %1878 = vmatpush.bf16.msra.mxu0 %v1188
    %1879 = vmatpush.bf16.msra.mxu0 %v1177
    %1880 = vmatmul.bf16.gmra.mxu0 %v250
    %v1881 = vpop.f32.mrf.mxu0
    %v1882 = vadd.f32 %v1868, %v1881
    %v1883 = vpop.f32.mrf.mxu0
    %v1884 = vadd.f32 %v1870, %v1883
    %1885 = vdwg.mxu0
    %1886 = vmatpush.bf16.msra.mxu0 0
    %1887 = vmatpush.bf16.msra.mxu0 0
    %1888 = vmatpush.bf16.msra.mxu0 0
    %1889 = vmatpush.bf16.msra.mxu0 0
    %1890 = vmatpush.bf16.msra.mxu0 0
    %1891 = vmatpush.bf16.msra.mxu0 0
    %1892 = vmatpush.bf16.msra.mxu0 %v1276
    %1893 = vmatpush.bf16.msra.mxu0 %v1265
    %1894 = vmatmul.bf16.gmra.mxu0 %v1478
    %v1895 = vpop.f32.mrf.mxu0
    %v1896 = vadd.f32 %v1882, %v1895
    %v1897 = vpop.f32.mrf.mxu0
    %v1898 = vadd.f32 %v1884, %v1897
    %1899 = vdwg.mxu0
    %1900 = vmatpush.bf16.msra.mxu0 %v1167
    %1901 = vmatpush.bf16.msra.mxu0 %v1156
    %1902 = vmatpush.bf16.msra.mxu0 %v1145
    %1903 = vmatpush.bf16.msra.mxu0 %v1134
    %1904 = vmatpush.bf16.msra.mxu0 %v1123
    %1905 = vmatpush.bf16.msra.mxu0 %v1112
    %1906 = vmatpush.bf16.msra.mxu0 %v1101
    %1907 = vmatpush.bf16.msra.mxu0 %v1090
    %1908 = vmatmul.bf16.gmra.mxu0 %v249
    %v1909 = vpop.f32.mrf.mxu0
    %v1910 = vadd.f32 0.0, %v1909
    %v1911 = vpop.f32.mrf.mxu0
    %v1912 = vadd.f32 0.0, %v1911
    %1913 = vdwg.mxu0
    %1914 = vmatpush.bf16.msra.mxu0 %v1255
    %1915 = vmatpush.bf16.msra.mxu0 %v1244
    %1916 = vmatpush.bf16.msra.mxu0 %v1233
    %1917 = vmatpush.bf16.msra.mxu0 %v1222
    %1918 = vmatpush.bf16.msra.mxu0 %v1211
    %1919 = vmatpush.bf16.msra.mxu0 %v1200
    %1920 = vmatpush.bf16.msra.mxu0 %v1189
    %1921 = vmatpush.bf16.msra.mxu0 %v1178
    %1922 = vmatmul.bf16.gmra.mxu0 %v250
    %v1923 = vpop.f32.mrf.mxu0
    %v1924 = vadd.f32 %v1910, %v1923
    %v1925 = vpop.f32.mrf.mxu0
    %v1926 = vadd.f32 %v1912, %v1925
    %1927 = vdwg.mxu0
    %1928 = vmatpush.bf16.msra.mxu0 0
    %1929 = vmatpush.bf16.msra.mxu0 0
    %1930 = vmatpush.bf16.msra.mxu0 0
    %1931 = vmatpush.bf16.msra.mxu0 0
    %1932 = vmatpush.bf16.msra.mxu0 0
    %1933 = vmatpush.bf16.msra.mxu0 0
    %1934 = vmatpush.bf16.msra.mxu0 %v1277
    %1935 = vmatpush.bf16.msra.mxu0 %v1266
    %1936 = vmatmul.bf16.gmra.mxu0 %v1478
    %v1937 = vpop.f32.mrf.mxu0
    %v1938 = vadd.f32 %v1924, %v1937
    %v1939 = vpop.f32.mrf.mxu0
    %v1940 = vadd.f32 %v1926, %v1939
    %1941 = vdwg.mxu0
    %v1942 = vpack.c.bf16 %v1560, %v1518
    %v1943 = vpack.c.bf16 %v1644, %v1602
    %v1944 = vpack.c.bf16 %v1728, %v1686
    %v1945 = vpack.c.bf16 %v1812, %v1770
    %v1946 = vpack.c.bf16 %v1896, %v1854
    %v1947 = vpack.c.bf16 %v1938, %v1938
    %v1948 = vpack.c.bf16 %v1562, %v1520
    %v1949 = vpack.c.bf16 %v1646, %v1604
    %v1950 = vpack.c.bf16 %v1730, %v1688
    %v1951 = vpack.c.bf16 %v1814, %v1772
    %v1952 = vpack.c.bf16 %v1898, %v1856
    %v1953 = vpack.c.bf16 %v1940, %v1940
    %v1964 = vunpack.c.l.b16 %v1942
    %v1965 = vunpack.c.h.b16 %v1942
    %v1966 = vunpack.c.l.b16 %v1943
    %v1967 = vunpack.c.h.b16 %v1943
    %v1968 = vunpack.c.l.b16 %v1944
    %v1969 = vunpack.c.h.b16 %v1944
    %v1970 = vunpack.c.l.b16 %v1945
    %v1971 = vunpack.c.h.b16 %v1945
    %v1972 = vunpack.c.l.b16 %v1946
    %v1973 = vunpack.c.h.b16 %v1946
    %v1974 = vunpack.c.l.b16 %v1948
    %v1975 = vunpack.c.h.b16 %v1948
    %v1976 = vunpack.c.l.b16 %v1949
    %v1977 = vunpack.c.h.b16 %v1949
    %v1978 = vunpack.c.l.b16 %v1950
    %v1979 = vunpack.c.h.b16 %v1950
    %v1980 = vunpack.c.l.b16 %v1951
    %v1981 = vunpack.c.h.b16 %v1951
    %v1982 = vunpack.c.l.b16 %v1952
    %v1983 = vunpack.c.h.b16 %v1952
    %v1984 = vpack.c.b16 %v1974, %v1964
    %v1985 = vpack.c.b16 %v1975, %v1965
    %v1986 = vpack.c.b16 %v1976, %v1966
    %v1987 = vpack.c.b16 %v1977, %v1967
    %v1988 = vpack.c.b16 %v1978, %v1968
    %v1989 = vpack.c.b16 %v1979, %v1969
    %v1990 = vpack.c.b16 %v1980, %v1970
    %v1991 = vpack.c.b16 %v1981, %v1971
    %v1992 = vpack.c.b16 %v1982, %v1972
    %v1993 = vpack.c.b16 %v1983, %v1973
    %1994 = vrot.lane.b32.xlu0 %v1984, 127
    %v1995 = vpop.permute.xlu0 %1994
    %1996 = vrot.lane.b32.xlu0 %v1985, 127
    %v1997 = vpop.permute.xlu0 %1996
    %1998 = vrot.lane.b32.xlu0 %v1986, 127
    %v1999 = vpop.permute.xlu0 %1998
    %2000 = vrot.lane.b32.xlu0 %v1987, 127
    %v2001 = vpop.permute.xlu0 %2000
    %2002 = vrot.lane.b32.xlu0 %v1988, 127
    %v2003 = vpop.permute.xlu0 %2002
    %2004 = vrot.lane.b32.xlu0 %v1989, 127
    %v2005 = vpop.permute.xlu0 %2004
    %2006 = vrot.lane.b32.xlu0 %v1990, 127
    %v2007 = vpop.permute.xlu0 %2006
    %2008 = vrot.lane.b32.xlu0 %v1991, 127
    %v2009 = vpop.permute.xlu0 %2008
    %2010 = vrot.lane.b32.xlu0 %v1992, 127
    %v2011 = vpop.permute.xlu0 %2010
    %2012 = vrot.lane.b32.xlu0 %v1993, 127
    %v2013 = vpop.permute.xlu0 %2012
    %vm2014 = vcmask 1039360
    %v2015 = vsel %vm2014, %v1995, %v1997
    %v2016 = vsel %vm2014, %v1997, %v1999
    %v2017 = vsel %vm2014, %v1999, %v2001
    %v2018 = vsel %vm2014, %v2001, %v2003
    %v2019 = vsel %vm2014, %v2003, %v2005
    %v2020 = vsel %vm2014, %v2005, %v2007
    %v2021 = vsel %vm2014, %v2007, %v2009
    %v2022 = vsel %vm2014, %v2009, %v2011
    %v2023 = vsel %vm2014, %v2011, %v2013
    %2024 = vrot.lane.b32.xlu0 %v1984, 126
    %v2025 = vpop.permute.xlu0 %2024
    %2026 = vrot.lane.b32.xlu0 %v1985, 126
    %v2027 = vpop.permute.xlu0 %2026
    %2028 = vrot.lane.b32.xlu0 %v1986, 126
    %v2029 = vpop.permute.xlu0 %2028
    %2030 = vrot.lane.b32.xlu0 %v1987, 126
    %v2031 = vpop.permute.xlu0 %2030
    %2032 = vrot.lane.b32.xlu0 %v1988, 126
    %v2033 = vpop.permute.xlu0 %2032
    %2034 = vrot.lane.b32.xlu0 %v1989, 126
    %v2035 = vpop.permute.xlu0 %2034
    %2036 = vrot.lane.b32.xlu0 %v1990, 126
    %v2037 = vpop.permute.xlu0 %2036
    %2038 = vrot.lane.b32.xlu0 %v1991, 126
    %v2039 = vpop.permute.xlu0 %2038
    %2040 = vrot.lane.b32.xlu0 %v1992, 126
    %v2041 = vpop.permute.xlu0 %2040
    %2042 = vrot.lane.b32.xlu0 %v1993, 126
    %v2043 = vpop.permute.xlu0 %2042
    %vm2044 = vcmask 1031168
    %v2045 = vsel %vm2044, %v2025, %v2027
    %v2046 = vsel %vm2044, %v2027, %v2029
    %v2047 = vsel %vm2044, %v2029, %v2031
    %v2048 = vsel %vm2044, %v2031, %v2033
    %v2049 = vsel %vm2044, %v2033, %v2035
    %v2050 = vsel %vm2044, %v2035, %v2037
    %v2051 = vsel %vm2044, %v2037, %v2039
    %v2052 = vsel %vm2044, %v2039, %v2041
    %v2053 = vsel %vm2044, %v2041, %v2043
    %2054 = vrot.lane.b32.xlu0 %v1984, 125
    %v2055 = vpop.permute.xlu0 %2054
    %2056 = vrot.lane.b32.xlu0 %v1985, 125
    %v2057 = vpop.permute.xlu0 %2056
    %2058 = vrot.lane.b32.xlu0 %v1986, 125
    %v2059 = vpop.permute.xlu0 %2058
    %2060 = vrot.lane.b32.xlu0 %v1987, 125
    %v2061 = vpop.permute.xlu0 %2060
    %2062 = vrot.lane.b32.xlu0 %v1988, 125
    %v2063 = vpop.permute.xlu0 %2062
    %2064 = vrot.lane.b32.xlu0 %v1989, 125
    %v2065 = vpop.permute.xlu0 %2064
    %2066 = vrot.lane.b32.xlu0 %v1990, 125
    %v2067 = vpop.permute.xlu0 %2066
    %2068 = vrot.lane.b32.xlu0 %v1991, 125
    %v2069 = vpop.permute.xlu0 %2068
    %2070 = vrot.lane.b32.xlu0 %v1992, 125
    %v2071 = vpop.permute.xlu0 %2070
    %2072 = vrot.lane.b32.xlu0 %v1993, 125
    %v2073 = vpop.permute.xlu0 %2072
    %vm2074 = vcmask 1022976
    %v2075 = vsel %vm2074, %v2055, %v2057
    %v2076 = vsel %vm2074, %v2057, %v2059
    %v2077 = vsel %vm2074, %v2059, %v2061
    %v2078 = vsel %vm2074, %v2061, %v2063
    %v2079 = vsel %vm2074, %v2063, %v2065
    %v2080 = vsel %vm2074, %v2065, %v2067
    %v2081 = vsel %vm2074, %v2067, %v2069
    %v2082 = vsel %vm2074, %v2069, %v2071
    %v2083 = vsel %vm2074, %v2071, %v2073
    %2084 = vrot.lane.b32.xlu0 %v1984, 91
    %v2085 = vpop.permute.xlu0 %2084
    %2086 = vrot.lane.b32.xlu0 %v1985, 91
    %v2087 = vpop.permute.xlu0 %2086
    %2088 = vrot.lane.b32.xlu0 %v1986, 91
    %v2089 = vpop.permute.xlu0 %2088
    %2090 = vrot.lane.b32.xlu0 %v1987, 91
    %v2091 = vpop.permute.xlu0 %2090
    %2092 = vrot.lane.b32.xlu0 %v1988, 91
    %v2093 = vpop.permute.xlu0 %2092
    %2094 = vrot.lane.b32.xlu0 %v1989, 91
    %v2095 = vpop.permute.xlu0 %2094
    %2096 = vrot.lane.b32.xlu0 %v1990, 91
    %v2097 = vpop.permute.xlu0 %2096
    %2098 = vrot.lane.b32.xlu0 %v1991, 91
    %v2099 = vpop.permute.xlu0 %2098
    %2100 = vrot.lane.b32.xlu0 %v1992, 91
    %v2101 = vpop.permute.xlu0 %2100
    %2102 = vrot.lane.b32.xlu0 %v1993, 91
    %v2103 = vpop.permute.xlu0 %2102
    %vm2104 = vcmask 744448
    %v2105 = vsel %vm2104, %v2085, %v2087
    %v2106 = vsel %vm2104, %v2087, %v2089
    %v2107 = vsel %vm2104, %v2089, %v2091
    %v2108 = vsel %vm2104, %v2091, %v2093
    %v2109 = vsel %vm2104, %v2093, %v2095
    %v2110 = vsel %vm2104, %v2095, %v2097
    %v2111 = vsel %vm2104, %v2097, %v2099
    %v2112 = vsel %vm2104, %v2099, %v2101
    %v2113 = vsel %vm2104, %v2101, %v2103
    %2114 = vrot.lane.b32.xlu0 %v1984, 90
    %v2115 = vpop.permute.xlu0 %2114
    %2116 = vrot.lane.b32.xlu0 %v1985, 90
    %v2117 = vpop.permute.xlu0 %2116
    %2118 = vrot.lane.b32.xlu0 %v1986, 90
    %v2119 = vpop.permute.xlu0 %2118
    %2120 = vrot.lane.b32.xlu0 %v1987, 90
    %v2121 = vpop.permute.xlu0 %2120
    %2122 = vrot.lane.b32.xlu0 %v1988, 90
    %v2123 = vpop.permute.xlu0 %2122
    %2124 = vrot.lane.b32.xlu0 %v1989, 90
    %v2125 = vpop.permute.xlu0 %2124
    %2126 = vrot.lane.b32.xlu0 %v1990, 90
    %v2127 = vpop.permute.xlu0 %2126
    %2128 = vrot.lane.b32.xlu0 %v1991, 90
    %v2129 = vpop.permute.xlu0 %2128
    %2130 = vrot.lane.b32.xlu0 %v1992, 90
    %v2131 = vpop.permute.xlu0 %2130
    %2132 = vrot.lane.b32.xlu0 %v1993, 90
    %v2133 = vpop.permute.xlu0 %2132
    %vm2134 = vcmask 736256
    %v2135 = vsel %vm2134, %v2115, %v2117
    %v2136 = vsel %vm2134, %v2117, %v2119
    %v2137 = vsel %vm2134, %v2119, %v2121
    %v2138 = vsel %vm2134, %v2121, %v2123
    %v2139 = vsel %vm2134, %v2123, %v2125
    %v2140 = vsel %vm2134, %v2125, %v2127
    %v2141 = vsel %vm2134, %v2127, %v2129
    %v2142 = vsel %vm2134, %v2129, %v2131
    %v2143 = vsel %vm2134, %v2131, %v2133
    %2144 = vrot.lane.b32.xlu0 %v1984, 89
    %v2145 = vpop.permute.xlu0 %2144
    %2146 = vrot.lane.b32.xlu0 %v1985, 89
    %v2147 = vpop.permute.xlu0 %2146
    %2148 = vrot.lane.b32.xlu0 %v1986, 89
    %v2149 = vpop.permute.xlu0 %2148
    %2150 = vrot.lane.b32.xlu0 %v1987, 89
    %v2151 = vpop.permute.xlu0 %2150
    %2152 = vrot.lane.b32.xlu0 %v1988, 89
    %v2153 = vpop.permute.xlu0 %2152
    %2154 = vrot.lane.b32.xlu0 %v1989, 89
    %v2155 = vpop.permute.xlu0 %2154
    %2156 = vrot.lane.b32.xlu0 %v1990, 89
    %v2157 = vpop.permute.xlu0 %2156
    %2158 = vrot.lane.b32.xlu0 %v1991, 89
    %v2159 = vpop.permute.xlu0 %2158
    %2160 = vrot.lane.b32.xlu0 %v1992, 89
    %v2161 = vpop.permute.xlu0 %2160
    %2162 = vrot.lane.b32.xlu0 %v1993, 89
    %v2163 = vpop.permute.xlu0 %2162
    %vm2164 = vcmask 728064
    %v2165 = vsel %vm2164, %v2145, %v2147
    %v2166 = vsel %vm2164, %v2147, %v2149
    %v2167 = vsel %vm2164, %v2149, %v2151
    %v2168 = vsel %vm2164, %v2151, %v2153
    %v2169 = vsel %vm2164, %v2153, %v2155
    %v2170 = vsel %vm2164, %v2155, %v2157
    %v2171 = vsel %vm2164, %v2157, %v2159
    %v2172 = vsel %vm2164, %v2159, %v2161
    %v2173 = vsel %vm2164, %v2161, %v2163
    %2174 = vrot.lane.b32.xlu0 %v1984, 88
    %v2175 = vpop.permute.xlu0 %2174
    %2176 = vrot.lane.b32.xlu0 %v1985, 88
    %v2177 = vpop.permute.xlu0 %2176
    %2178 = vrot.lane.b32.xlu0 %v1986, 88
    %v2179 = vpop.permute.xlu0 %2178
    %2180 = vrot.lane.b32.xlu0 %v1987, 88
    %v2181 = vpop.permute.xlu0 %2180
    %2182 = vrot.lane.b32.xlu0 %v1988, 88
    %v2183 = vpop.permute.xlu0 %2182
    %2184 = vrot.lane.b32.xlu0 %v1989, 88
    %v2185 = vpop.permute.xlu0 %2184
    %2186 = vrot.lane.b32.xlu0 %v1990, 88
    %v2187 = vpop.permute.xlu0 %2186
    %2188 = vrot.lane.b32.xlu0 %v1991, 88
    %v2189 = vpop.permute.xlu0 %2188
    %2190 = vrot.lane.b32.xlu0 %v1992, 88
    %v2191 = vpop.permute.xlu0 %2190
    %2192 = vrot.lane.b32.xlu0 %v1993, 88
    %v2193 = vpop.permute.xlu0 %2192
    %vm2194 = vcmask 719872
    %v2195 = vsel %vm2194, %v2175, %v2177
    %v2196 = vsel %vm2194, %v2177, %v2179
    %v2197 = vsel %vm2194, %v2179, %v2181
    %v2198 = vsel %vm2194, %v2181, %v2183
    %v2199 = vsel %vm2194, %v2183, %v2185
    %v2200 = vsel %vm2194, %v2185, %v2187
    %v2201 = vsel %vm2194, %v2187, %v2189
    %v2202 = vsel %vm2194, %v2189, %v2191
    %v2203 = vsel %vm2194, %v2191, %v2193
    %v2206 = vunpack.c.l.b16 %v1947
    %v2207 = vunpack.c.l.b16 %v1953
    %v2208 = vpack.c.b16 %v2207, %v2206
    %2209 = vrot.lane.b32.xlu0 %v1984, 54
    %v2210 = vpop.permute.xlu0 %2209
    %2211 = vrot.lane.b32.xlu0 %v1985, 54
    %v2212 = vpop.permute.xlu0 %2211
    %2213 = vrot.lane.b32.xlu0 %v1986, 54
    %v2214 = vpop.permute.xlu0 %2213
    %2215 = vrot.lane.b32.xlu0 %v1987, 54
    %v2216 = vpop.permute.xlu0 %2215
    %2217 = vrot.lane.b32.xlu0 %v1988, 54
    %v2218 = vpop.permute.xlu0 %2217
    %2219 = vrot.lane.b32.xlu0 %v1989, 54
    %v2220 = vpop.permute.xlu0 %2219
    %2221 = vrot.lane.b32.xlu0 %v1990, 54
    %v2222 = vpop.permute.xlu0 %2221
    %2223 = vrot.lane.b32.xlu0 %v1991, 54
    %v2224 = vpop.permute.xlu0 %2223
    %2225 = vrot.lane.b32.xlu0 %v1992, 54
    %v2226 = vpop.permute.xlu0 %2225
    %2227 = vrot.lane.b32.xlu0 %v1993, 54
    %v2228 = vpop.permute.xlu0 %2227
    %2229 = vrot.lane.b32.xlu0 %v2208, 54
    %v2230 = vpop.permute.xlu0 %2229
    %vm2231 = vcmask 441344
    %v2232 = vsel %vm2231, %v2210, %v2212
    %v2233 = vsel %vm2231, %v2212, %v2214
    %v2234 = vsel %vm2231, %v2214, %v2216
    %v2235 = vsel %vm2231, %v2216, %v2218
    %v2236 = vsel %vm2231, %v2218, %v2220
    %v2237 = vsel %vm2231, %v2220, %v2222
    %v2238 = vsel %vm2231, %v2222, %v2224
    %v2239 = vsel %vm2231, %v2224, %v2226
    %v2240 = vsel %vm2231, %v2226, %v2228
    %v2241 = vsel %vm2231, %v2228, %v2230
    %2242 = vrot.lane.b32.xlu0 %v1984, 53
    %v2243 = vpop.permute.xlu0 %2242
    %2244 = vrot.lane.b32.xlu0 %v1985, 53
    %v2245 = vpop.permute.xlu0 %2244
    %2246 = vrot.lane.b32.xlu0 %v1986, 53
    %v2247 = vpop.permute.xlu0 %2246
    %2248 = vrot.lane.b32.xlu0 %v1987, 53
    %v2249 = vpop.permute.xlu0 %2248
    %2250 = vrot.lane.b32.xlu0 %v1988, 53
    %v2251 = vpop.permute.xlu0 %2250
    %2252 = vrot.lane.b32.xlu0 %v1989, 53
    %v2253 = vpop.permute.xlu0 %2252
    %2254 = vrot.lane.b32.xlu0 %v1990, 53
    %v2255 = vpop.permute.xlu0 %2254
    %2256 = vrot.lane.b32.xlu0 %v1991, 53
    %v2257 = vpop.permute.xlu0 %2256
    %2258 = vrot.lane.b32.xlu0 %v1992, 53
    %v2259 = vpop.permute.xlu0 %2258
    %2260 = vrot.lane.b32.xlu0 %v1993, 53
    %v2261 = vpop.permute.xlu0 %2260
    %2262 = vrot.lane.b32.xlu0 %v2208, 53
    %v2263 = vpop.permute.xlu0 %2262
    %vm2264 = vcmask 433152
    %v2265 = vsel %vm2264, %v2243, %v2245
    %v2266 = vsel %vm2264, %v2245, %v2247
    %v2267 = vsel %vm2264, %v2247, %v2249
    %v2268 = vsel %vm2264, %v2249, %v2251
    %v2269 = vsel %vm2264, %v2251, %v2253
    %v2270 = vsel %vm2264, %v2253, %v2255
    %v2271 = vsel %vm2264, %v2255, %v2257
    %v2272 = vsel %vm2264, %v2257, %v2259
    %v2273 = vsel %vm2264, %v2259, %v2261
    %v2274 = vsel %vm2264, %v2261, %v2263
    %2275 = vrot.lane.b32.xlu0 %v1984, 52
    %v2276 = vpop.permute.xlu0 %2275
    %2277 = vrot.lane.b32.xlu0 %v1985, 52
    %v2278 = vpop.permute.xlu0 %2277
    %2279 = vrot.lane.b32.xlu0 %v1986, 52
    %v2280 = vpop.permute.xlu0 %2279
    %2281 = vrot.lane.b32.xlu0 %v1987, 52
    %v2282 = vpop.permute.xlu0 %2281
    %2283 = vrot.lane.b32.xlu0 %v1988, 52
    %v2284 = vpop.permute.xlu0 %2283
    %2285 = vrot.lane.b32.xlu0 %v1989, 52
    %v2286 = vpop.permute.xlu0 %2285
    %2287 = vrot.lane.b32.xlu0 %v1990, 52
    %v2288 = vpop.permute.xlu0 %2287
    %2289 = vrot.lane.b32.xlu0 %v1991, 52
    %v2290 = vpop.permute.xlu0 %2289
    %2291 = vrot.lane.b32.xlu0 %v1992, 52
    %v2292 = vpop.permute.xlu0 %2291
    %2293 = vrot.lane.b32.xlu0 %v1993, 52
    %v2294 = vpop.permute.xlu0 %2293
    %2295 = vrot.lane.b32.xlu0 %v2208, 52
    %v2296 = vpop.permute.xlu0 %2295
    %vm2297 = vcmask 424960
    %v2298 = vsel %vm2297, %v2276, %v2278
    %v2299 = vsel %vm2297, %v2278, %v2280
    %v2300 = vsel %vm2297, %v2280, %v2282
    %v2301 = vsel %vm2297, %v2282, %v2284
    %v2302 = vsel %vm2297, %v2284, %v2286
    %v2303 = vsel %vm2297, %v2286, %v2288
    %v2304 = vsel %vm2297, %v2288, %v2290
    %v2305 = vsel %vm2297, %v2290, %v2292
    %v2306 = vsel %vm2297, %v2292, %v2294
    %v2307 = vsel %vm2297, %v2294, %v2296
    %2308 = vrot.lane.b32.xlu0 %v1984, 51
    %v2309 = vpop.permute.xlu0 %2308
    %2310 = vrot.lane.b32.xlu0 %v1985, 51
    %v2311 = vpop.permute.xlu0 %2310
    %2312 = vrot.lane.b32.xlu0 %v1986, 51
    %v2313 = vpop.permute.xlu0 %2312
    %2314 = vrot.lane.b32.xlu0 %v1987, 51
    %v2315 = vpop.permute.xlu0 %2314
    %2316 = vrot.lane.b32.xlu0 %v1988, 51
    %v2317 = vpop.permute.xlu0 %2316
    %2318 = vrot.lane.b32.xlu0 %v1989, 51
    %v2319 = vpop.permute.xlu0 %2318
    %2320 = vrot.lane.b32.xlu0 %v1990, 51
    %v2321 = vpop.permute.xlu0 %2320
    %2322 = vrot.lane.b32.xlu0 %v1991, 51
    %v2323 = vpop.permute.xlu0 %2322
    %2324 = vrot.lane.b32.xlu0 %v1992, 51
    %v2325 = vpop.permute.xlu0 %2324
    %2326 = vrot.lane.b32.xlu0 %v1993, 51
    %v2327 = vpop.permute.xlu0 %2326
    %2328 = vrot.lane.b32.xlu0 %v2208, 51
    %v2329 = vpop.permute.xlu0 %2328
    %vm2330 = vcmask 416768
    %v2331 = vsel %vm2330, %v2309, %v2311
    %v2332 = vsel %vm2330, %v2311, %v2313
    %v2333 = vsel %vm2330, %v2313, %v2315
    %v2334 = vsel %vm2330, %v2315, %v2317
    %v2335 = vsel %vm2330, %v2317, %v2319
    %v2336 = vsel %vm2330, %v2319, %v2321
    %v2337 = vsel %vm2330, %v2321, %v2323
    %v2338 = vsel %vm2330, %v2323, %v2325
    %v2339 = vsel %vm2330, %v2325, %v2327
    %v2340 = vsel %vm2330, %v2327, %v2329
    %2341 = vrot.lane.b32.xlu0 %v1985, 17
    %v2342 = vpop.permute.xlu0 %2341
    %2343 = vrot.lane.b32.xlu0 %v1986, 17
    %v2344 = vpop.permute.xlu0 %2343
    %2345 = vrot.lane.b32.xlu0 %v1987, 17
    %v2346 = vpop.permute.xlu0 %2345
    %2347 = vrot.lane.b32.xlu0 %v1988, 17
    %v2348 = vpop.permute.xlu0 %2347
    %2349 = vrot.lane.b32.xlu0 %v1989, 17
    %v2350 = vpop.permute.xlu0 %2349
    %2351 = vrot.lane.b32.xlu0 %v1990, 17
    %v2352 = vpop.permute.xlu0 %2351
    %2353 = vrot.lane.b32.xlu0 %v1991, 17
    %v2354 = vpop.permute.xlu0 %2353
    %2355 = vrot.lane.b32.xlu0 %v1992, 17
    %v2356 = vpop.permute.xlu0 %2355
    %2357 = vrot.lane.b32.xlu0 %v1993, 17
    %v2358 = vpop.permute.xlu0 %2357
    %2359 = vrot.lane.b32.xlu0 %v2208, 17
    %v2360 = vpop.permute.xlu0 %2359
    %vm2361 = vcmask 138240
    %v2362 = vsel %vm2361, %v2342, %v2344
    %v2363 = vsel %vm2361, %v2344, %v2346
    %v2364 = vsel %vm2361, %v2346, %v2348
    %v2365 = vsel %vm2361, %v2348, %v2350
    %v2366 = vsel %vm2361, %v2350, %v2352
    %v2367 = vsel %vm2361, %v2352, %v2354
    %v2368 = vsel %vm2361, %v2354, %v2356
    %v2369 = vsel %vm2361, %v2356, %v2358
    %v2370 = vsel %vm2361, %v2358, %v2360
    %2371 = vrot.lane.b32.xlu0 %v1985, 16
    %v2372 = vpop.permute.xlu0 %2371
    %2373 = vrot.lane.b32.xlu0 %v1986, 16
    %v2374 = vpop.permute.xlu0 %2373
    %2375 = vrot.lane.b32.xlu0 %v1987, 16
    %v2376 = vpop.permute.xlu0 %2375
    %2377 = vrot.lane.b32.xlu0 %v1988, 16
    %v2378 = vpop.permute.xlu0 %2377
    %2379 = vrot.lane.b32.xlu0 %v1989, 16
    %v2380 = vpop.permute.xlu0 %2379
    %2381 = vrot.lane.b32.xlu0 %v1990, 16
    %v2382 = vpop.permute.xlu0 %2381
    %2383 = vrot.lane.b32.xlu0 %v1991, 16
    %v2384 = vpop.permute.xlu0 %2383
    %2385 = vrot.lane.b32.xlu0 %v1992, 16
    %v2386 = vpop.permute.xlu0 %2385
    %2387 = vrot.lane.b32.xlu0 %v1993, 16
    %v2388 = vpop.permute.xlu0 %2387
    %2389 = vrot.lane.b32.xlu0 %v2208, 16
    %v2390 = vpop.permute.xlu0 %2389
    %vm2391 = vcmask 130048
    %v2392 = vsel %vm2391, %v2372, %v2374
    %v2393 = vsel %vm2391, %v2374, %v2376
    %v2394 = vsel %vm2391, %v2376, %v2378
    %v2395 = vsel %vm2391, %v2378, %v2380
    %v2396 = vsel %vm2391, %v2380, %v2382
    %v2397 = vsel %vm2391, %v2382, %v2384
    %v2398 = vsel %vm2391, %v2384, %v2386
    %v2399 = vsel %vm2391, %v2386, %v2388
    %v2400 = vsel %vm2391, %v2388, %v2390
    %2401 = vrot.lane.b32.xlu0 %v1985, 15
    %v2402 = vpop.permute.xlu0 %2401
    %2403 = vrot.lane.b32.xlu0 %v1986, 15
    %v2404 = vpop.permute.xlu0 %2403
    %2405 = vrot.lane.b32.xlu0 %v1987, 15
    %v2406 = vpop.permute.xlu0 %2405
    %2407 = vrot.lane.b32.xlu0 %v1988, 15
    %v2408 = vpop.permute.xlu0 %2407
    %2409 = vrot.lane.b32.xlu0 %v1989, 15
    %v2410 = vpop.permute.xlu0 %2409
    %2411 = vrot.lane.b32.xlu0 %v1990, 15
    %v2412 = vpop.permute.xlu0 %2411
    %2413 = vrot.lane.b32.xlu0 %v1991, 15
    %v2414 = vpop.permute.xlu0 %2413
    %2415 = vrot.lane.b32.xlu0 %v1992, 15
    %v2416 = vpop.permute.xlu0 %2415
    %2417 = vrot.lane.b32.xlu0 %v1993, 15
    %v2418 = vpop.permute.xlu0 %2417
    %2419 = vrot.lane.b32.xlu0 %v2208, 15
    %v2420 = vpop.permute.xlu0 %2419
    %vm2421 = vcmask 121856
    %v2422 = vsel %vm2421, %v2402, %v2404
    %v2423 = vsel %vm2421, %v2404, %v2406
    %v2424 = vsel %vm2421, %v2406, %v2408
    %v2425 = vsel %vm2421, %v2408, %v2410
    %v2426 = vsel %vm2421, %v2410, %v2412
    %v2427 = vsel %vm2421, %v2412, %v2414
    %v2428 = vsel %vm2421, %v2414, %v2416
    %v2429 = vsel %vm2421, %v2416, %v2418
    %v2430 = vsel %vm2421, %v2418, %v2420
    %2431 = vrot.lane.b32.xlu0 %v1985, 14
    %v2432 = vpop.permute.xlu0 %2431
    %2433 = vrot.lane.b32.xlu0 %v1986, 14
    %v2434 = vpop.permute.xlu0 %2433
    %2435 = vrot.lane.b32.xlu0 %v1987, 14
    %v2436 = vpop.permute.xlu0 %2435
    %2437 = vrot.lane.b32.xlu0 %v1988, 14
    %v2438 = vpop.permute.xlu0 %2437
    %2439 = vrot.lane.b32.xlu0 %v1989, 14
    %v2440 = vpop.permute.xlu0 %2439
    %2441 = vrot.lane.b32.xlu0 %v1990, 14
    %v2442 = vpop.permute.xlu0 %2441
    %2443 = vrot.lane.b32.xlu0 %v1991, 14
    %v2444 = vpop.permute.xlu0 %2443
    %2445 = vrot.lane.b32.xlu0 %v1992, 14
    %v2446 = vpop.permute.xlu0 %2445
    %2447 = vrot.lane.b32.xlu0 %v1993, 14
    %v2448 = vpop.permute.xlu0 %2447
    %2449 = vrot.lane.b32.xlu0 %v2208, 14
    %v2450 = vpop.permute.xlu0 %2449
    %vm2451 = vcmask 113664
    %v2452 = vsel %vm2451, %v2432, %v2434
    %v2453 = vsel %vm2451, %v2434, %v2436
    %v2454 = vsel %vm2451, %v2436, %v2438
    %v2455 = vsel %vm2451, %v2438, %v2440
    %v2456 = vsel %vm2451, %v2440, %v2442
    %v2457 = vsel %vm2451, %v2442, %v2444
    %v2458 = vsel %vm2451, %v2444, %v2446
    %v2459 = vsel %vm2451, %v2446, %v2448
    %v2460 = vsel %vm2451, %v2448, %v2450
    %v2461 = vld [vmem:[#allocation5] sm:$0xff]
    %v2462 = vld [vmem:[#allocation5 + $0x8] sm:$0xff]
    %v2463 = vld [vmem:[%s5] sm:$0xff]
    %v2464 = vld [vmem:[%s5 + $0x8] sm:$0xff]
    %2466 = vset.pattern.permute.xlu0 0
    %2467 = vperm.xlu0 %2466, %v2463
    %v2468 = vpop.permute.xlu0 %2467
    %2471 = vset.pattern.permute.xlu0 0
    %2472 = vperm.xlu0 %2471, %v2464
    %v2473 = vpop.permute.xlu0 %2472
    %v2477 = vunpack.c.l.b16 %v2461
    %v2478 = vunpack.c.h.b16 %v2461
    %v2479 = vunpack.c.l.b16 %v2462
    %v2480 = vunpack.c.h.b16 %v2462
    %v2481 = vpack.c.b16 %v2479, %v2477
    %v2482 = vpack.c.b16 %v2480, %v2478
    %2485 = vrot.lane.b32.xlu0 %v2015, 90
    %v2486 = vpop.permute.xlu0 %2485
    %2487 = vrot.lane.b32.xlu0 %v2016, 90
    %v2488 = vpop.permute.xlu0 %2487
    %2489 = vrot.lane.b32.xlu0 %v2017, 90
    %v2490 = vpop.permute.xlu0 %2489
    %2491 = vrot.lane.b32.xlu0 %v2018, 90
    %v2492 = vpop.permute.xlu0 %2491
    %2493 = vrot.lane.b32.xlu0 %v2019, 90
    %v2494 = vpop.permute.xlu0 %2493
    %2495 = vrot.lane.b32.xlu0 %v2020, 90
    %v2496 = vpop.permute.xlu0 %2495
    %2497 = vrot.lane.b32.xlu0 %v2021, 90
    %v2498 = vpop.permute.xlu0 %2497
    %2499 = vrot.lane.b32.xlu0 %v2022, 90
    %v2500 = vpop.permute.xlu0 %2499
    %2501 = vrot.lane.b32.xlu0 %v2023, 90
    %v2502 = vpop.permute.xlu0 %2501
    %2503 = vrot.lane.b32.xlu0 %v2013, 90
    %v2504 = vpop.permute.xlu0 %2503
    %2505 = vrot.lane.b32.xlu0 %v2045, 90
    %v2506 = vpop.permute.xlu0 %2505
    %2507 = vrot.lane.b32.xlu0 %v2046, 90
    %v2508 = vpop.permute.xlu0 %2507
    %2509 = vrot.lane.b32.xlu0 %v2047, 90
    %v2510 = vpop.permute.xlu0 %2509
    %2511 = vrot.lane.b32.xlu0 %v2048, 90
    %v2512 = vpop.permute.xlu0 %2511
    %2513 = vrot.lane.b32.xlu0 %v2049, 90
    %v2514 = vpop.permute.xlu0 %2513
    %2515 = vrot.lane.b32.xlu0 %v2050, 90
    %v2516 = vpop.permute.xlu0 %2515
    %2517 = vrot.lane.b32.xlu0 %v2051, 90
    %v2518 = vpop.permute.xlu0 %2517
    %2519 = vrot.lane.b32.xlu0 %v2052, 90
    %v2520 = vpop.permute.xlu0 %2519
    %2521 = vrot.lane.b32.xlu0 %v2053, 90
    %v2522 = vpop.permute.xlu0 %2521
    %2523 = vrot.lane.b32.xlu0 %v2043, 90
    %v2524 = vpop.permute.xlu0 %2523
    %2525 = vrot.lane.b32.xlu0 %v2075, 90
    %v2526 = vpop.permute.xlu0 %2525
    %2527 = vrot.lane.b32.xlu0 %v2076, 90
    %v2528 = vpop.permute.xlu0 %2527
    %2529 = vrot.lane.b32.xlu0 %v2077, 90
    %v2530 = vpop.permute.xlu0 %2529
    %2531 = vrot.lane.b32.xlu0 %v2078, 90
    %v2532 = vpop.permute.xlu0 %2531
    %2533 = vrot.lane.b32.xlu0 %v2079, 90
    %v2534 = vpop.permute.xlu0 %2533
    %2535 = vrot.lane.b32.xlu0 %v2080, 90
    %v2536 = vpop.permute.xlu0 %2535
    %2537 = vrot.lane.b32.xlu0 %v2081, 90
    %v2538 = vpop.permute.xlu0 %2537
    %2539 = vrot.lane.b32.xlu0 %v2082, 90
    %v2540 = vpop.permute.xlu0 %2539
    %2541 = vrot.lane.b32.xlu0 %v2083, 90
    %v2542 = vpop.permute.xlu0 %2541
    %2543 = vrot.lane.b32.xlu0 %v2073, 90
    %v2544 = vpop.permute.xlu0 %2543
    %2545 = vrot.lane.b32.xlu0 %v2105, 90
    %v2546 = vpop.permute.xlu0 %2545
    %2547 = vrot.lane.b32.xlu0 %v2106, 90
    %v2548 = vpop.permute.xlu0 %2547
    %2549 = vrot.lane.b32.xlu0 %v2107, 90
    %v2550 = vpop.permute.xlu0 %2549
    %2551 = vrot.lane.b32.xlu0 %v2108, 90
    %v2552 = vpop.permute.xlu0 %2551
    %2553 = vrot.lane.b32.xlu0 %v2109, 90
    %v2554 = vpop.permute.xlu0 %2553
    %2555 = vrot.lane.b32.xlu0 %v2110, 90
    %v2556 = vpop.permute.xlu0 %2555
    %2557 = vrot.lane.b32.xlu0 %v2111, 90
    %v2558 = vpop.permute.xlu0 %2557
    %2559 = vrot.lane.b32.xlu0 %v2112, 90
    %v2560 = vpop.permute.xlu0 %2559
    %2561 = vrot.lane.b32.xlu0 %v2113, 90
    %v2562 = vpop.permute.xlu0 %2561
    %2563 = vrot.lane.b32.xlu0 %v2103, 90
    %v2564 = vpop.permute.xlu0 %2563
    %2565 = vrot.lane.b32.xlu0 %v2135, 90
    %v2566 = vpop.permute.xlu0 %2565
    %2567 = vrot.lane.b32.xlu0 %v2136, 90
    %v2568 = vpop.permute.xlu0 %2567
    %2569 = vrot.lane.b32.xlu0 %v2137, 90
    %v2570 = vpop.permute.xlu0 %2569
    %2571 = vrot.lane.b32.xlu0 %v2138, 90
    %v2572 = vpop.permute.xlu0 %2571
    %2573 = vrot.lane.b32.xlu0 %v2139, 90
    %v2574 = vpop.permute.xlu0 %2573
    %2575 = vrot.lane.b32.xlu0 %v2140, 90
    %v2576 = vpop.permute.xlu0 %2575
    %2577 = vrot.lane.b32.xlu0 %v2141, 90
    %v2578 = vpop.permute.xlu0 %2577
    %2579 = vrot.lane.b32.xlu0 %v2142, 90
    %v2580 = vpop.permute.xlu0 %2579
    %2581 = vrot.lane.b32.xlu0 %v2143, 90
    %v2582 = vpop.permute.xlu0 %2581
    %2583 = vrot.lane.b32.xlu0 %v2133, 90
    %v2584 = vpop.permute.xlu0 %2583
    %2585 = vrot.lane.b32.xlu0 %v2165, 90
    %v2586 = vpop.permute.xlu0 %2585
    %2587 = vrot.lane.b32.xlu0 %v2166, 90
    %v2588 = vpop.permute.xlu0 %2587
    %2589 = vrot.lane.b32.xlu0 %v2167, 90
    %v2590 = vpop.permute.xlu0 %2589
    %2591 = vrot.lane.b32.xlu0 %v2168, 90
    %v2592 = vpop.permute.xlu0 %2591
    %2593 = vrot.lane.b32.xlu0 %v2169, 90
    %v2594 = vpop.permute.xlu0 %2593
    %2595 = vrot.lane.b32.xlu0 %v2170, 90
    %v2596 = vpop.permute.xlu0 %2595
    %2597 = vrot.lane.b32.xlu0 %v2171, 90
    %v2598 = vpop.permute.xlu0 %2597
    %2599 = vrot.lane.b32.xlu0 %v2172, 90
    %v2600 = vpop.permute.xlu0 %2599
    %2601 = vrot.lane.b32.xlu0 %v2173, 90
    %v2602 = vpop.permute.xlu0 %2601
    %2603 = vrot.lane.b32.xlu0 %v2163, 90
    %v2604 = vpop.permute.xlu0 %2603
    %2605 = vrot.lane.b32.xlu0 %v2195, 90
    %v2606 = vpop.permute.xlu0 %2605
    %2607 = vrot.lane.b32.xlu0 %v2196, 90
    %v2608 = vpop.permute.xlu0 %2607
    %2609 = vrot.lane.b32.xlu0 %v2197, 90
    %v2610 = vpop.permute.xlu0 %2609
    %2611 = vrot.lane.b32.xlu0 %v2198, 90
    %v2612 = vpop.permute.xlu0 %2611
    %2613 = vrot.lane.b32.xlu0 %v2199, 90
    %v2614 = vpop.permute.xlu0 %2613
    %2615 = vrot.lane.b32.xlu0 %v2200, 90
    %v2616 = vpop.permute.xlu0 %2615
    %2617 = vrot.lane.b32.xlu0 %v2201, 90
    %v2618 = vpop.permute.xlu0 %2617
    %2619 = vrot.lane.b32.xlu0 %v2202, 90
    %v2620 = vpop.permute.xlu0 %2619
    %2621 = vrot.lane.b32.xlu0 %v2203, 90
    %v2622 = vpop.permute.xlu0 %2621
    %2623 = vrot.lane.b32.xlu0 %v2193, 90
    %v2624 = vpop.permute.xlu0 %2623
    %2625 = vrot.lane.b32.xlu0 %v2232, 90
    %v2626 = vpop.permute.xlu0 %2625
    %2627 = vrot.lane.b32.xlu0 %v2233, 90
    %v2628 = vpop.permute.xlu0 %2627
    %2629 = vrot.lane.b32.xlu0 %v2234, 90
    %v2630 = vpop.permute.xlu0 %2629
    %2631 = vrot.lane.b32.xlu0 %v2235, 90
    %v2632 = vpop.permute.xlu0 %2631
    %2633 = vrot.lane.b32.xlu0 %v2236, 90
    %v2634 = vpop.permute.xlu0 %2633
    %2635 = vrot.lane.b32.xlu0 %v2237, 90
    %v2636 = vpop.permute.xlu0 %2635
    %2637 = vrot.lane.b32.xlu0 %v2238, 90
    %v2638 = vpop.permute.xlu0 %2637
    %2639 = vrot.lane.b32.xlu0 %v2239, 90
    %v2640 = vpop.permute.xlu0 %2639
    %2641 = vrot.lane.b32.xlu0 %v2240, 90
    %v2642 = vpop.permute.xlu0 %2641
    %2643 = vrot.lane.b32.xlu0 %v2241, 90
    %v2644 = vpop.permute.xlu0 %2643
    %2645 = vrot.lane.b32.xlu0 %v2265, 90
    %v2646 = vpop.permute.xlu0 %2645
    %2647 = vrot.lane.b32.xlu0 %v2266, 90
    %v2648 = vpop.permute.xlu0 %2647
    %2649 = vrot.lane.b32.xlu0 %v2267, 90
    %v2650 = vpop.permute.xlu0 %2649
    %2651 = vrot.lane.b32.xlu0 %v2268, 90
    %v2652 = vpop.permute.xlu0 %2651
    %2653 = vrot.lane.b32.xlu0 %v2269, 90
    %v2654 = vpop.permute.xlu0 %2653
    %2655 = vrot.lane.b32.xlu0 %v2270, 90
    %v2656 = vpop.permute.xlu0 %2655
    %2657 = vrot.lane.b32.xlu0 %v2271, 90
    %v2658 = vpop.permute.xlu0 %2657
    %2659 = vrot.lane.b32.xlu0 %v2272, 90
    %v2660 = vpop.permute.xlu0 %2659
    %2661 = vrot.lane.b32.xlu0 %v2273, 90
    %v2662 = vpop.permute.xlu0 %2661
    %2663 = vrot.lane.b32.xlu0 %v2274, 90
    %v2664 = vpop.permute.xlu0 %2663
    %2665 = vrot.lane.b32.xlu0 %v2298, 90
    %v2666 = vpop.permute.xlu0 %2665
    %2667 = vrot.lane.b32.xlu0 %v2299, 90
    %v2668 = vpop.permute.xlu0 %2667
    %2669 = vrot.lane.b32.xlu0 %v2300, 90
    %v2670 = vpop.permute.xlu0 %2669
    %2671 = vrot.lane.b32.xlu0 %v2301, 90
    %v2672 = vpop.permute.xlu0 %2671
    %2673 = vrot.lane.b32.xlu0 %v2302, 90
    %v2674 = vpop.permute.xlu0 %2673
    %2675 = vrot.lane.b32.xlu0 %v2303, 90
    %v2676 = vpop.permute.xlu0 %2675
    %2677 = vrot.lane.b32.xlu0 %v2304, 90
    %v2678 = vpop.permute.xlu0 %2677
    %2679 = vrot.lane.b32.xlu0 %v2305, 90
    %v2680 = vpop.permute.xlu0 %2679
    %2681 = vrot.lane.b32.xlu0 %v2306, 90
    %v2682 = vpop.permute.xlu0 %2681
    %2683 = vrot.lane.b32.xlu0 %v2307, 90
    %v2684 = vpop.permute.xlu0 %2683
    %2685 = vrot.lane.b32.xlu0 %v2331, 90
    %v2686 = vpop.permute.xlu0 %2685
    %2687 = vrot.lane.b32.xlu0 %v2332, 90
    %v2688 = vpop.permute.xlu0 %2687
    %2689 = vrot.lane.b32.xlu0 %v2333, 90
    %v2690 = vpop.permute.xlu0 %2689
    %2691 = vrot.lane.b32.xlu0 %v2334, 90
    %v2692 = vpop.permute.xlu0 %2691
    %2693 = vrot.lane.b32.xlu0 %v2335, 90
    %v2694 = vpop.permute.xlu0 %2693
    %2695 = vrot.lane.b32.xlu0 %v2336, 90
    %v2696 = vpop.permute.xlu0 %2695
    %2697 = vrot.lane.b32.xlu0 %v2337, 90
    %v2698 = vpop.permute.xlu0 %2697
    %2699 = vrot.lane.b32.xlu0 %v2338, 90
    %v2700 = vpop.permute.xlu0 %2699
    %2701 = vrot.lane.b32.xlu0 %v2339, 90
    %v2702 = vpop.permute.xlu0 %2701
    %2703 = vrot.lane.b32.xlu0 %v2340, 90
    %v2704 = vpop.permute.xlu0 %2703
    %2705 = vrot.lane.b32.xlu0 %v2342, 90
    %v2706 = vpop.permute.xlu0 %2705
    %2707 = vrot.lane.b32.xlu0 %v2362, 90
    %v2708 = vpop.permute.xlu0 %2707
    %2709 = vrot.lane.b32.xlu0 %v2363, 90
    %v2710 = vpop.permute.xlu0 %2709
    %2711 = vrot.lane.b32.xlu0 %v2364, 90
    %v2712 = vpop.permute.xlu0 %2711
    %2713 = vrot.lane.b32.xlu0 %v2365, 90
    %v2714 = vpop.permute.xlu0 %2713
    %2715 = vrot.lane.b32.xlu0 %v2366, 90
    %v2716 = vpop.permute.xlu0 %2715
    %2717 = vrot.lane.b32.xlu0 %v2367, 90
    %v2718 = vpop.permute.xlu0 %2717
    %2719 = vrot.lane.b32.xlu0 %v2368, 90
    %v2720 = vpop.permute.xlu0 %2719
    %2721 = vrot.lane.b32.xlu0 %v2369, 90
    %v2722 = vpop.permute.xlu0 %2721
    %2723 = vrot.lane.b32.xlu0 %v2370, 90
    %v2724 = vpop.permute.xlu0 %2723
    %2725 = vrot.lane.b32.xlu0 %v2372, 90
    %v2726 = vpop.permute.xlu0 %2725
    %2727 = vrot.lane.b32.xlu0 %v2392, 90
    %v2728 = vpop.permute.xlu0 %2727
    %2729 = vrot.lane.b32.xlu0 %v2393, 90
    %v2730 = vpop.permute.xlu0 %2729
    %2731 = vrot.lane.b32.xlu0 %v2394, 90
    %v2732 = vpop.permute.xlu0 %2731
    %2733 = vrot.lane.b32.xlu0 %v2395, 90
    %v2734 = vpop.permute.xlu0 %2733
    %2735 = vrot.lane.b32.xlu0 %v2396, 90
    %v2736 = vpop.permute.xlu0 %2735
    %2737 = vrot.lane.b32.xlu0 %v2397, 90
    %v2738 = vpop.permute.xlu0 %2737
    %2739 = vrot.lane.b32.xlu0 %v2398, 90
    %v2740 = vpop.permute.xlu0 %2739
    %2741 = vrot.lane.b32.xlu0 %v2399, 90
    %v2742 = vpop.permute.xlu0 %2741
    %2743 = vrot.lane.b32.xlu0 %v2400, 90
    %v2744 = vpop.permute.xlu0 %2743
    %2745 = vrot.lane.b32.xlu0 %v2402, 90
    %v2746 = vpop.permute.xlu0 %2745
    %2747 = vrot.lane.b32.xlu0 %v2422, 90
    %v2748 = vpop.permute.xlu0 %2747
    %2749 = vrot.lane.b32.xlu0 %v2423, 90
    %v2750 = vpop.permute.xlu0 %2749
    %2751 = vrot.lane.b32.xlu0 %v2424, 90
    %v2752 = vpop.permute.xlu0 %2751
    %2753 = vrot.lane.b32.xlu0 %v2425, 90
    %v2754 = vpop.permute.xlu0 %2753
    %2755 = vrot.lane.b32.xlu0 %v2426, 90
    %v2756 = vpop.permute.xlu0 %2755
    %2757 = vrot.lane.b32.xlu0 %v2427, 90
    %v2758 = vpop.permute.xlu0 %2757
    %2759 = vrot.lane.b32.xlu0 %v2428, 90
    %v2760 = vpop.permute.xlu0 %2759
    %2761 = vrot.lane.b32.xlu0 %v2429, 90
    %v2762 = vpop.permute.xlu0 %2761
    %2763 = vrot.lane.b32.xlu0 %v2430, 90
    %v2764 = vpop.permute.xlu0 %2763
    %2765 = vrot.lane.b32.xlu0 %v2432, 90
    %v2766 = vpop.permute.xlu0 %2765
    %2767 = vrot.lane.b32.xlu0 %v2452, 90
    %v2768 = vpop.permute.xlu0 %2767
    %2769 = vrot.lane.b32.xlu0 %v2453, 90
    %v2770 = vpop.permute.xlu0 %2769
    %2771 = vrot.lane.b32.xlu0 %v2454, 90
    %v2772 = vpop.permute.xlu0 %2771
    %2773 = vrot.lane.b32.xlu0 %v2455, 90
    %v2774 = vpop.permute.xlu0 %2773
    %2775 = vrot.lane.b32.xlu0 %v2456, 90
    %v2776 = vpop.permute.xlu0 %2775
    %2777 = vrot.lane.b32.xlu0 %v2457, 90
    %v2778 = vpop.permute.xlu0 %2777
    %2779 = vrot.lane.b32.xlu0 %v2458, 90
    %v2780 = vpop.permute.xlu0 %2779
    %2781 = vrot.lane.b32.xlu0 %v2459, 90
    %v2782 = vpop.permute.xlu0 %2781
    %2783 = vrot.lane.b32.xlu0 %v2460, 90
    %v2784 = vpop.permute.xlu0 %2783
    %v2785 = vsel %vm2134, %v2486, %v2488
    %v2786 = vsel %vm2134, %v2488, %v2490
    %v2787 = vsel %vm2134, %v2490, %v2492
    %v2788 = vsel %vm2134, %v2492, %v2494
    %v2789 = vsel %vm2134, %v2494, %v2496
    %v2790 = vsel %vm2134, %v2496, %v2498
    %v2791 = vsel %vm2134, %v2498, %v2500
    %v2792 = vsel %vm2134, %v2500, %v2502
    %v2793 = vsel %vm2134, %v2502, %v2504
    %v2794 = vsel %vm2134, %v2506, %v2508
    %v2795 = vsel %vm2134, %v2508, %v2510
    %v2796 = vsel %vm2134, %v2510, %v2512
    %v2797 = vsel %vm2134, %v2512, %v2514
    %v2798 = vsel %vm2134, %v2514, %v2516
    %v2799 = vsel %vm2134, %v2516, %v2518
    %v2800 = vsel %vm2134, %v2518, %v2520
    %v2801 = vsel %vm2134, %v2520, %v2522
    %v2802 = vsel %vm2134, %v2522, %v2524
    %v2803 = vsel %vm2134, %v2526, %v2528
    %v2804 = vsel %vm2134, %v2528, %v2530
    %v2805 = vsel %vm2134, %v2530, %v2532
    %v2806 = vsel %vm2134, %v2532, %v2534
    %v2807 = vsel %vm2134, %v2534, %v2536
    %v2808 = vsel %vm2134, %v2536, %v2538
    %v2809 = vsel %vm2134, %v2538, %v2540
    %v2810 = vsel %vm2134, %v2540, %v2542
    %v2811 = vsel %vm2134, %v2542, %v2544
    %v2812 = vsel %vm2134, %v2546, %v2548
    %v2813 = vsel %vm2134, %v2548, %v2550
    %v2814 = vsel %vm2134, %v2550, %v2552
    %v2815 = vsel %vm2134, %v2552, %v2554
    %v2816 = vsel %vm2134, %v2554, %v2556
    %v2817 = vsel %vm2134, %v2556, %v2558
    %v2818 = vsel %vm2134, %v2558, %v2560
    %v2819 = vsel %vm2134, %v2560, %v2562
    %v2820 = vsel %vm2134, %v2562, %v2564
    %v2821 = vsel %vm2134, %v2566, %v2568
    %v2822 = vsel %vm2134, %v2568, %v2570
    %v2823 = vsel %vm2134, %v2570, %v2572
    %v2824 = vsel %vm2134, %v2572, %v2574
    %v2825 = vsel %vm2134, %v2574, %v2576
    %v2826 = vsel %vm2134, %v2576, %v2578
    %v2827 = vsel %vm2134, %v2578, %v2580
    %v2828 = vsel %vm2134, %v2580, %v2582
    %v2829 = vsel %vm2134, %v2582, %v2584
    %v2830 = vsel %vm2134, %v2586, %v2588
    %v2831 = vsel %vm2134, %v2588, %v2590
    %v2832 = vsel %vm2134, %v2590, %v2592
    %v2833 = vsel %vm2134, %v2592, %v2594
    %v2834 = vsel %vm2134, %v2594, %v2596
    %v2835 = vsel %vm2134, %v2596, %v2598
    %v2836 = vsel %vm2134, %v2598, %v2600
    %v2837 = vsel %vm2134, %v2600, %v2602
    %v2838 = vsel %vm2134, %v2602, %v2604
    %v2839 = vsel %vm2134, %v2606, %v2608
    %v2840 = vsel %vm2134, %v2608, %v2610
    %v2841 = vsel %vm2134, %v2610, %v2612
    %v2842 = vsel %vm2134, %v2612, %v2614
    %v2843 = vsel %vm2134, %v2614, %v2616
    %v2844 = vsel %vm2134, %v2616, %v2618
    %v2845 = vsel %vm2134, %v2618, %v2620
    %v2846 = vsel %vm2134, %v2620, %v2622
    %v2847 = vsel %vm2134, %v2622, %v2624
    %v2848 = vsel %vm2134, %v2626, %v2628
    %v2849 = vsel %vm2134, %v2628, %v2630
    %v2850 = vsel %vm2134, %v2630, %v2632
    %v2851 = vsel %vm2134, %v2632, %v2634
    %v2852 = vsel %vm2134, %v2634, %v2636
    %v2853 = vsel %vm2134, %v2636, %v2638
    %v2854 = vsel %vm2134, %v2638, %v2640
    %v2855 = vsel %vm2134, %v2640, %v2642
    %v2856 = vsel %vm2134, %v2642, %v2644
    %v2857 = vsel %vm2134, %v2646, %v2648
    %v2858 = vsel %vm2134, %v2648, %v2650
    %v2859 = vsel %vm2134, %v2650, %v2652
    %v2860 = vsel %vm2134, %v2652, %v2654
    %v2861 = vsel %vm2134, %v2654, %v2656
    %v2862 = vsel %vm2134, %v2656, %v2658
    %v2863 = vsel %vm2134, %v2658, %v2660
    %v2864 = vsel %vm2134, %v2660, %v2662
    %v2865 = vsel %vm2134, %v2662, %v2664
    %v2866 = vsel %vm2134, %v2666, %v2668
    %v2867 = vsel %vm2134, %v2668, %v2670
    %v2868 = vsel %vm2134, %v2670, %v2672
    %v2869 = vsel %vm2134, %v2672, %v2674
    %v2870 = vsel %vm2134, %v2674, %v2676
    %v2871 = vsel %vm2134, %v2676, %v2678
    %v2872 = vsel %vm2134, %v2678, %v2680
    %v2873 = vsel %vm2134, %v2680, %v2682
    %v2874 = vsel %vm2134, %v2682, %v2684
    %v2875 = vsel %vm2134, %v2686, %v2688
    %v2876 = vsel %vm2134, %v2688, %v2690
    %v2877 = vsel %vm2134, %v2690, %v2692
    %v2878 = vsel %vm2134, %v2692, %v2694
    %v2879 = vsel %vm2134, %v2694, %v2696
    %v2880 = vsel %vm2134, %v2696, %v2698
    %v2881 = vsel %vm2134, %v2698, %v2700
    %v2882 = vsel %vm2134, %v2700, %v2702
    %v2883 = vsel %vm2134, %v2702, %v2704
    %v2884 = vsel %vm2134, %v2706, %v2708
    %v2885 = vsel %vm2134, %v2708, %v2710
    %v2886 = vsel %vm2134, %v2710, %v2712
    %v2887 = vsel %vm2134, %v2712, %v2714
    %v2888 = vsel %vm2134, %v2714, %v2716
    %v2889 = vsel %vm2134, %v2716, %v2718
    %v2890 = vsel %vm2134, %v2718, %v2720
    %v2891 = vsel %vm2134, %v2720, %v2722
    %v2892 = vsel %vm2134, %v2722, %v2724
    %v2893 = vsel %vm2134, %v2726, %v2728
    %v2894 = vsel %vm2134, %v2728, %v2730
    %v2895 = vsel %vm2134, %v2730, %v2732
    %v2896 = vsel %vm2134, %v2732, %v2734
    %v2897 = vsel %vm2134, %v2734, %v2736
    %v2898 = vsel %vm2134, %v2736, %v2738
    %v2899 = vsel %vm2134, %v2738, %v2740
    %v2900 = vsel %vm2134, %v2740, %v2742
    %v2901 = vsel %vm2134, %v2742, %v2744
    %v2902 = vsel %vm2134, %v2746, %v2748
    %v2903 = vsel %vm2134, %v2748, %v2750
    %v2904 = vsel %vm2134, %v2750, %v2752
    %v2905 = vsel %vm2134, %v2752, %v2754
    %v2906 = vsel %vm2134, %v2754, %v2756
    %v2907 = vsel %vm2134, %v2756, %v2758
    %v2908 = vsel %vm2134, %v2758, %v2760
    %v2909 = vsel %vm2134, %v2760, %v2762
    %v2910 = vsel %vm2134, %v2762, %v2764
    %v2911 = vsel %vm2134, %v2766, %v2768
    %v2912 = vsel %vm2134, %v2768, %v2770
    %v2913 = vsel %vm2134, %v2770, %v2772
    %v2914 = vsel %vm2134, %v2772, %v2774
    %v2915 = vsel %vm2134, %v2774, %v2776
    %v2916 = vsel %vm2134, %v2776, %v2778
    %v2917 = vsel %vm2134, %v2778, %v2780
    %v2918 = vsel %vm2134, %v2780, %v2782
    %v2919 = vsel %vm2134, %v2782, %v2784
    %3080 = vmatpush.bf16.msra.mxu0 %v2839
    %3081 = vmatpush.bf16.msra.mxu0 %v2830
    %3082 = vmatpush.bf16.msra.mxu0 %v2821
    %3083 = vmatpush.bf16.msra.mxu0 %v2812
    %3084 = vmatpush.bf16.msra.mxu0 %v2803
    %3085 = vmatpush.bf16.msra.mxu0 %v2794
    %3086 = vmatpush.bf16.msra.mxu0 %v2785
    %3087 = vmatpush.bf16.msra.mxu0 %v2135
    %3088 = vmatmul.bf16.gmra.mxu0 %v2481
    %v3089 = vpop.f32.mrf.mxu0
    %v3090 = vadd.f32 %v2468, %v3089
    %v3091 = vpop.f32.mrf.mxu0
    %v3092 = vadd.f32 %v2473, %v3091
    %3093 = vdwg.mxu0
    %3094 = vmatpush.bf16.msra.mxu0 %v2911
    %3095 = vmatpush.bf16.msra.mxu0 %v2902
    %3096 = vmatpush.bf16.msra.mxu0 %v2893
    %3097 = vmatpush.bf16.msra.mxu0 %v2884
    %3098 = vmatpush.bf16.msra.mxu0 %v2875
    %3099 = vmatpush.bf16.msra.mxu0 %v2866
    %3100 = vmatpush.bf16.msra.mxu0 %v2857
    %3101 = vmatpush.bf16.msra.mxu0 %v2848
    %3102 = vmatmul.bf16.gmra.mxu0 %v2482
    %v3103 = vpop.f32.mrf.mxu0
    %v3104 = vadd.f32 %v3090, %v3103
    %v3105 = vpop.f32.mrf.mxu0
    %v3106 = vadd.f32 %v3092, %v3105
    %3107 = vdwg.mxu0
    %3108 = vmatpush.bf16.msra.mxu0 %v2840
    %3109 = vmatpush.bf16.msra.mxu0 %v2831
    %3110 = vmatpush.bf16.msra.mxu0 %v2822
    %3111 = vmatpush.bf16.msra.mxu0 %v2813
    %3112 = vmatpush.bf16.msra.mxu0 %v2804
    %3113 = vmatpush.bf16.msra.mxu0 %v2795
    %3114 = vmatpush.bf16.msra.mxu0 %v2786
    %3115 = vmatpush.bf16.msra.mxu0 %v2136
    %3116 = vmatmul.bf16.gmra.mxu0 %v2481
    %v3117 = vpop.f32.mrf.mxu0
    %v3118 = vadd.f32 %v2468, %v3117
    %v3119 = vpop.f32.mrf.mxu0
    %v3120 = vadd.f32 %v2473, %v3119
    %3121 = vdwg.mxu0
    %3122 = vmatpush.bf16.msra.mxu0 %v2912
    %3123 = vmatpush.bf16.msra.mxu0 %v2903
    %3124 = vmatpush.bf16.msra.mxu0 %v2894
    %3125 = vmatpush.bf16.msra.mxu0 %v2885
    %3126 = vmatpush.bf16.msra.mxu0 %v2876
    %3127 = vmatpush.bf16.msra.mxu0 %v2867
    %3128 = vmatpush.bf16.msra.mxu0 %v2858
    %3129 = vmatpush.bf16.msra.mxu0 %v2849
    %3130 = vmatmul.bf16.gmra.mxu0 %v2482
    %v3131 = vpop.f32.mrf.mxu0
    %v3132 = vadd.f32 %v3118, %v3131
    %v3133 = vpop.f32.mrf.mxu0
    %v3134 = vadd.f32 %v3120, %v3133
    %3135 = vdwg.mxu0
    %3136 = vmatpush.bf16.msra.mxu0 %v2841
    %3137 = vmatpush.bf16.msra.mxu0 %v2832
    %3138 = vmatpush.bf16.msra.mxu0 %v2823
    %3139 = vmatpush.bf16.msra.mxu0 %v2814
    %3140 = vmatpush.bf16.msra.mxu0 %v2805
    %3141 = vmatpush.bf16.msra.mxu0 %v2796
    %3142 = vmatpush.bf16.msra.mxu0 %v2787
    %3143 = vmatpush.bf16.msra.mxu0 %v2137
    %3144 = vmatmul.bf16.gmra.mxu0 %v2481
    %v3145 = vpop.f32.mrf.mxu0
    %v3146 = vadd.f32 %v2468, %v3145
    %v3147 = vpop.f32.mrf.mxu0
    %v3148 = vadd.f32 %v2473, %v3147
    %3149 = vdwg.mxu0
    %3150 = vmatpush.bf16.msra.mxu0 %v2913
    %3151 = vmatpush.bf16.msra.mxu0 %v2904
    %3152 = vmatpush.bf16.msra.mxu0 %v2895
    %3153 = vmatpush.bf16.msra.mxu0 %v2886
    %3154 = vmatpush.bf16.msra.mxu0 %v2877
    %3155 = vmatpush.bf16.msra.mxu0 %v2868
    %3156 = vmatpush.bf16.msra.mxu0 %v2859
    %3157 = vmatpush.bf16.msra.mxu0 %v2850
    %3158 = vmatmul.bf16.gmra.mxu0 %v2482
    %v3159 = vpop.f32.mrf.mxu0
    %v3160 = vadd.f32 %v3146, %v3159
    %v3161 = vpop.f32.mrf.mxu0
    %v3162 = vadd.f32 %v3148, %v3161
    %3163 = vdwg.mxu0
    %3164 = vmatpush.bf16.msra.mxu0 %v2842
    %3165 = vmatpush.bf16.msra.mxu0 %v2833
    %3166 = vmatpush.bf16.msra.mxu0 %v2824
    %3167 = vmatpush.bf16.msra.mxu0 %v2815
    %3168 = vmatpush.bf16.msra.mxu0 %v2806
    %3169 = vmatpush.bf16.msra.mxu0 %v2797
    %3170 = vmatpush.bf16.msra.mxu0 %v2788
    %3171 = vmatpush.bf16.msra.mxu0 %v2138
    %3172 = vmatmul.bf16.gmra.mxu0 %v2481
    %v3173 = vpop.f32.mrf.mxu0
    %v3174 = vadd.f32 %v2468, %v3173
    %v3175 = vpop.f32.mrf.mxu0
    %v3176 = vadd.f32 %v2473, %v3175
    %3177 = vdwg.mxu0
    %3178 = vmatpush.bf16.msra.mxu0 %v2914
    %3179 = vmatpush.bf16.msra.mxu0 %v2905
    %3180 = vmatpush.bf16.msra.mxu0 %v2896
    %3181 = vmatpush.bf16.msra.mxu0 %v2887
    %3182 = vmatpush.bf16.msra.mxu0 %v2878
    %3183 = vmatpush.bf16.msra.mxu0 %v2869
    %3184 = vmatpush.bf16.msra.mxu0 %v2860
    %3185 = vmatpush.bf16.msra.mxu0 %v2851
    %3186 = vmatmul.bf16.gmra.mxu0 %v2482
    %v3187 = vpop.f32.mrf.mxu0
    %v3188 = vadd.f32 %v3174, %v3187
    %v3189 = vpop.f32.mrf.mxu0
    %v3190 = vadd.f32 %v3176, %v3189
    %3191 = vdwg.mxu0
    %3192 = vmatpush.bf16.msra.mxu0 %v2843
    %3193 = vmatpush.bf16.msra.mxu0 %v2834
    %3194 = vmatpush.bf16.msra.mxu0 %v2825
    %3195 = vmatpush.bf16.msra.mxu0 %v2816
    %3196 = vmatpush.bf16.msra.mxu0 %v2807
    %3197 = vmatpush.bf16.msra.mxu0 %v2798
    %3198 = vmatpush.bf16.msra.mxu0 %v2789
    %3199 = vmatpush.bf16.msra.mxu0 %v2139
    %3200 = vmatmul.bf16.gmra.mxu0 %v2481
    %v3201 = vpop.f32.mrf.mxu0
    %v3202 = vadd.f32 %v2468, %v3201
    %v3203 = vpop.f32.mrf.mxu0
    %v3204 = vadd.f32 %v2473, %v3203
    %3205 = vdwg.mxu0
    %3206 = vmatpush.bf16.msra.mxu0 %v2915
    %3207 = vmatpush.bf16.msra.mxu0 %v2906
    %3208 = vmatpush.bf16.msra.mxu0 %v2897
    %3209 = vmatpush.bf16.msra.mxu0 %v2888
    %3210 = vmatpush.bf16.msra.mxu0 %v2879
    %3211 = vmatpush.bf16.msra.mxu0 %v2870
    %3212 = vmatpush.bf16.msra.mxu0 %v2861
    %3213 = vmatpush.bf16.msra.mxu0 %v2852
    %3214 = vmatmul.bf16.gmra.mxu0 %v2482
    %v3215 = vpop.f32.mrf.mxu0
    %v3216 = vadd.f32 %v3202, %v3215
    %v3217 = vpop.f32.mrf.mxu0
    %v3218 = vadd.f32 %v3204, %v3217
    %3219 = vdwg.mxu0
    %3220 = vmatpush.bf16.msra.mxu0 %v2844
    %3221 = vmatpush.bf16.msra.mxu0 %v2835
    %3222 = vmatpush.bf16.msra.mxu0 %v2826
    %3223 = vmatpush.bf16.msra.mxu0 %v2817
    %3224 = vmatpush.bf16.msra.mxu0 %v2808
    %3225 = vmatpush.bf16.msra.mxu0 %v2799
    %3226 = vmatpush.bf16.msra.mxu0 %v2790
    %3227 = vmatpush.bf16.msra.mxu0 %v2140
    %3228 = vmatmul.bf16.gmra.mxu0 %v2481
    %v3229 = vpop.f32.mrf.mxu0
    %v3230 = vadd.f32 %v2468, %v3229
    %v3231 = vpop.f32.mrf.mxu0
    %v3232 = vadd.f32 %v2473, %v3231
    %3233 = vdwg.mxu0
    %3234 = vmatpush.bf16.msra.mxu0 %v2916
    %3235 = vmatpush.bf16.msra.mxu0 %v2907
    %3236 = vmatpush.bf16.msra.mxu0 %v2898
    %3237 = vmatpush.bf16.msra.mxu0 %v2889
    %3238 = vmatpush.bf16.msra.mxu0 %v2880
    %3239 = vmatpush.bf16.msra.mxu0 %v2871
    %3240 = vmatpush.bf16.msra.mxu0 %v2862
    %3241 = vmatpush.bf16.msra.mxu0 %v2853
    %3242 = vmatmul.bf16.gmra.mxu0 %v2482
    %v3243 = vpop.f32.mrf.mxu0
    %v3244 = vadd.f32 %v3230, %v3243
    %v3245 = vpop.f32.mrf.mxu0
    %v3246 = vadd.f32 %v3232, %v3245
    %3247 = vdwg.mxu0
    %3248 = vmatpush.bf16.msra.mxu0 %v2845
    %3249 = vmatpush.bf16.msra.mxu0 %v2836
    %3250 = vmatpush.bf16.msra.mxu0 %v2827
    %3251 = vmatpush.bf16.msra.mxu0 %v2818
    %3252 = vmatpush.bf16.msra.mxu0 %v2809
    %3253 = vmatpush.bf16.msra.mxu0 %v2800
    %3254 = vmatpush.bf16.msra.mxu0 %v2791
    %3255 = vmatpush.bf16.msra.mxu0 %v2141
    %3256 = vmatmul.bf16.gmra.mxu0 %v2481
    %v3257 = vpop.f32.mrf.mxu0
    %v3258 = vadd.f32 %v2468, %v3257
    %v3259 = vpop.f32.mrf.mxu0
    %v3260 = vadd.f32 %v2473, %v3259
    %3261 = vdwg.mxu0
    %3262 = vmatpush.bf16.msra.mxu0 %v2917
    %3263 = vmatpush.bf16.msra.mxu0 %v2908
    %3264 = vmatpush.bf16.msra.mxu0 %v2899
    %3265 = vmatpush.bf16.msra.mxu0 %v2890
    %3266 = vmatpush.bf16.msra.mxu0 %v2881
    %3267 = vmatpush.bf16.msra.mxu0 %v2872
    %3268 = vmatpush.bf16.msra.mxu0 %v2863
    %3269 = vmatpush.bf16.msra.mxu0 %v2854
    %3270 = vmatmul.bf16.gmra.mxu0 %v2482
    %v3271 = vpop.f32.mrf.mxu0
    %v3272 = vadd.f32 %v3258, %v3271
    %v3273 = vpop.f32.mrf.mxu0
    %v3274 = vadd.f32 %v3260, %v3273
    %3275 = vdwg.mxu0
    %3276 = vmatpush.bf16.msra.mxu0 %v2846
    %3277 = vmatpush.bf16.msra.mxu0 %v2837
    %3278 = vmatpush.bf16.msra.mxu0 %v2828
    %3279 = vmatpush.bf16.msra.mxu0 %v2819
    %3280 = vmatpush.bf16.msra.mxu0 %v2810
    %3281 = vmatpush.bf16.msra.mxu0 %v2801
    %3282 = vmatpush.bf16.msra.mxu0 %v2792
    %3283 = vmatpush.bf16.msra.mxu0 %v2142
    %3284 = vmatmul.bf16.gmra.mxu0 %v2481
    %v3285 = vpop.f32.mrf.mxu0
    %v3286 = vadd.f32 %v2468, %v3285
    %v3287 = vpop.f32.mrf.mxu0
    %v3288 = vadd.f32 %v2473, %v3287
    %3289 = vdwg.mxu0
    %3290 = vmatpush.bf16.msra.mxu0 %v2918
    %3291 = vmatpush.bf16.msra.mxu0 %v2909
    %3292 = vmatpush.bf16.msra.mxu0 %v2900
    %3293 = vmatpush.bf16.msra.mxu0 %v2891
    %3294 = vmatpush.bf16.msra.mxu0 %v2882
    %3295 = vmatpush.bf16.msra.mxu0 %v2873
    %3296 = vmatpush.bf16.msra.mxu0 %v2864
    %3297 = vmatpush.bf16.msra.mxu0 %v2855
    %3298 = vmatmul.bf16.gmra.mxu0 %v2482
    %v3299 = vpop.f32.mrf.mxu0
    %v3300 = vadd.f32 %v3286, %v3299
    %v3301 = vpop.f32.mrf.mxu0
    %v3302 = vadd.f32 %v3288, %v3301
    %3303 = vdwg.mxu0
    %3304 = vmatpush.bf16.msra.mxu0 %v2847
    %3305 = vmatpush.bf16.msra.mxu0 %v2838
    %3306 = vmatpush.bf16.msra.mxu0 %v2829
    %3307 = vmatpush.bf16.msra.mxu0 %v2820
    %3308 = vmatpush.bf16.msra.mxu0 %v2811
    %3309 = vmatpush.bf16.msra.mxu0 %v2802
    %3310 = vmatpush.bf16.msra.mxu0 %v2793
    %3311 = vmatpush.bf16.msra.mxu0 %v2143
    %3312 = vmatmul.bf16.gmra.mxu0 %v2481
    %v3313 = vpop.f32.mrf.mxu0
    %v3314 = vadd.f32 %v2468, %v3313
    %v3315 = vpop.f32.mrf.mxu0
    %v3316 = vadd.f32 %v2473, %v3315
    %3317 = vdwg.mxu0
    %3318 = vmatpush.bf16.msra.mxu0 %v2919
    %3319 = vmatpush.bf16.msra.mxu0 %v2910
    %3320 = vmatpush.bf16.msra.mxu0 %v2901
    %3321 = vmatpush.bf16.msra.mxu0 %v2892
    %3322 = vmatpush.bf16.msra.mxu0 %v2883
    %3323 = vmatpush.bf16.msra.mxu0 %v2874
    %3324 = vmatpush.bf16.msra.mxu0 %v2865
    %3325 = vmatpush.bf16.msra.mxu0 %v2856
    %3326 = vmatmul.bf16.gmra.mxu0 %v2482
    %v3327 = vpop.f32.mrf.mxu0
    %v3328 = vadd.f32 %v3314, %v3327
    %v3329 = vpop.f32.mrf.mxu0
    %v3330 = vadd.f32 %v3316, %v3329
    %3331 = vdwg.mxu0
    %3332 = vmatpush.bf16.msra.mxu0 %v2624
    %3333 = vmatpush.bf16.msra.mxu0 %v2604
    %3334 = vmatpush.bf16.msra.mxu0 %v2584
    %3335 = vmatpush.bf16.msra.mxu0 %v2564
    %3336 = vmatpush.bf16.msra.mxu0 %v2544
    %3337 = vmatpush.bf16.msra.mxu0 %v2524
    %3338 = vmatpush.bf16.msra.mxu0 %v2504
    %3339 = vmatpush.bf16.msra.mxu0 %v2133
    %3340 = vmatmul.bf16.gmra.mxu0 %v2481
    %v3341 = vpop.f32.mrf.mxu0
    %v3342 = vadd.f32 %v2468, %v3341
    %v3343 = vpop.f32.mrf.mxu0
    %v3344 = vadd.f32 %v2473, %v3343
    %3345 = vdwg.mxu0
    %3346 = vmatpush.bf16.msra.mxu0 %v2784
    %3347 = vmatpush.bf16.msra.mxu0 %v2764
    %3348 = vmatpush.bf16.msra.mxu0 %v2744
    %3349 = vmatpush.bf16.msra.mxu0 %v2724
    %3350 = vmatpush.bf16.msra.mxu0 %v2704
    %3351 = vmatpush.bf16.msra.mxu0 %v2684
    %3352 = vmatpush.bf16.msra.mxu0 %v2664
    %3353 = vmatpush.bf16.msra.mxu0 %v2644
    %3354 = vmatmul.bf16.gmra.mxu0 %v2482
    %v3355 = vpop.f32.mrf.mxu0
    %v3356 = vadd.f32 %v3342, %v3355
    %v3357 = vpop.f32.mrf.mxu0
    %v3358 = vadd.f32 %v3344, %v3357
    %3359 = vdwg.mxu0
    %3360 = vst [vmem:[#allocation7] sm:$0xff] %v3104
    %3361 = vst [vmem:[#allocation7 + $0x8] sm:$0xff] %v3132
    %3362 = vst [vmem:[#allocation7 + $0x10] sm:$0xff] %v3160
    %3363 = vst [vmem:[#allocation7 + $0x18] sm:$0xff] %v3188
    %3364 = vst [vmem:[#allocation7 + $0x20] sm:$0xff] %v3216
    %3365 = vst [vmem:[#allocation7 + $0x28] sm:$0xff] %v3244
    %3366 = vst [vmem:[#allocation7 + $0x30] sm:$0xff] %v3272
    %3367 = vst [vmem:[#allocation7 + $0x38] sm:$0xff] %v3300
    %3368 = vst [vmem:[#allocation7 + $0x40] sm:$0xff] %v3328
    %3369 = vst.msk [vmem:[#allocation7 + $0x48] sm:$0xff] %vm1476, %v3356
    %3370 = vst [vmem:[#allocation7 + $0x50] sm:$0xff] %v3106
    %3371 = vst [vmem:[#allocation7 + $0x58] sm:$0xff] %v3134
    %3372 = vst [vmem:[#allocation7 + $0x60] sm:$0xff] %v3162
    %3373 = vst [vmem:[#allocation7 + $0x68] sm:$0xff] %v3190
    %3374 = vst [vmem:[#allocation7 + $0x70] sm:$0xff] %v3218
    %3375 = vst [vmem:[#allocation7 + $0x78] sm:$0xff] %v3246
    %3376 = vst [vmem:[#allocation7 + $0x80] sm:$0xff] %v3274
    %3377 = vst [vmem:[#allocation7 + $0x88] sm:$0xff] %v3302
    %3378 = vst [vmem:[#allocation7 + $0x90] sm:$0xff] %v3330
    %3379 = vst.msk [vmem:[#allocation7 + $0x98] sm:$0xff] %vm1476, %v3358
    // Predicated region
    $region34: #{tpu_custom_call.1} parent=1 // pred_check
      _
    $region35: #{tpu_custom_call.1} parent=1 // pred_check_branch
      %3381 = sbr.rel (0) target = $region37
    $region36: #{tpu_custom_call.1} parent=1 // pred_region
      %3383 = vsyncadd [#allocation4], 0
      %s3384 = sshll.u32 [#allocation7], 4
      %s3385 = int_to_ptr.vmem [resolvable:$true] %s3384
      %s3386 = sshll.u32 %s6, 4
      %s3387 = int_to_ptr.hbm [resolvable:$true] %s3386
      %3392 = dma.vmem_to_hbm [thread:$0]  %s3385, 2560, %s3387, [#allocation4], 1280, 1280, 80
    $region37: #{tpu_custom_call.1} parent=1 // pred_fallthru
      _
    // Predicated region
    $region38: #{tpu_custom_call.1} parent=1 // pred_check
      _
    $region39: #{tpu_custom_call.1} parent=1 // pred_check_branch
      %3394 = sbr.rel (0) target = $region41
    $region40: #{tpu_custom_call.1} parent=1 // pred_region
      %3396 = dma.done [#allocation4], 2560
    $region41: #{tpu_custom_call.1} parent=1 // pred_fallthru
      _
    %3397 = vsyncpa [#allocation3], 1
    %3398 = vsyncpa [#allocation6], 1
    %3399 = vsyncpa [#allocation4], 1

</llo_original>
